<compile_context>
chip_gen: v5e
topology: v5e:2x2
jax: 0.10.0
libtpu: 0.0.40
codegen_flags: <defaults>
</compile_context>

<pallas_src>
import math

import jax
import jax.numpy as jnp
import numpy as np
from jax.experimental import pallas as pl
from jax.experimental.pallas import tpu as pltpu


# ---------------------------------------------------------------------------
# math helpers
# ---------------------------------------------------------------------------
_INV_SQRT2 = 1.0 / math.sqrt(2.0)
_SQRT_2_OVER_PI = math.sqrt(2.0 / math.pi)


def _gelu_tanh(x):
    # tanh-approximate GELU: routes to the EUP (transcendental slot) instead of
    # a long erf polynomial on the VPU.  |err| vs erf-GELU ~1e-3.
    return 0.5 * x * (1.0 + jnp.tanh(_SQRT_2_OVER_PI * (x + 0.044715 * x * x * x)))


def _gelu_exact(x):
    # exact (erf) GELU, matching torch.nn.GELU() — used by the f32 reference.
    return 0.5 * x * (1.0 + jax.lax.erf(x * _INV_SQRT2))


def _layernorm(x, g, b, eps=1e-5):
    mu = jnp.mean(x, axis=-1, keepdims=True)
    var = jnp.mean((x - mu) ** 2, axis=-1, keepdims=True)
    return (x - mu) * jax.lax.rsqrt(var + eps) * g + b


# ---------------------------------------------------------------------------
# packed-parameter row layout (one [NUM_VEC_ROWS, D] f32 table)
# ---------------------------------------------------------------------------
ROW_DC = 0       # delta_t-scaled diffusion taps + bias (center tap folds -x)
ROW_LB1 = 4      # local-update MLP biases
ROW_LB2 = 5
ROW_TNG = 6      # token-mixer LayerNorm gamma / beta
ROW_TNB = 7
ROW_T1 = 8       # token-mixer conv1 taps + bias -> rows 8..11
ROW_T2 = 12      # token-mixer conv2 taps + bias -> rows 12..15
ROW_BQ = 16      # attention projection biases
ROW_BK = 17
ROW_BV = 18
ROW_FB1 = 19     # feed-forward biases
ROW_FB2 = 20
ROW_N1G = 21     # norm1 / norm2 gamma / beta
ROW_N1B = 22
ROW_N2G = 23
ROW_N2B = 24
NUM_VEC_ROWS = 32  # padded to a sublane multiple


# ---------------------------------------------------------------------------
# Pallas kernel: DiffuRNNLayer forward for a (Bt, N, D) batch tile
# ---------------------------------------------------------------------------
def diffurnn_kernel(x_ref, vecs_ref, w_in_ref, lw2_ref, fw1_ref, fw2_ref, o_ref):
    f32 = jnp.float32
    bf16 = jnp.bfloat16
    Bt, N, D = x_ref.shape
    M = Bt * N

    x = x_ref[...].astype(f32).reshape(M, D)        # flat (tokens, embed)

    # per-token position inside its sequence (zero-padding mask for the convs)
    tok = jax.lax.broadcasted_iota(jnp.int32, (M, 1), 0)
    pos = jax.lax.rem(tok, N)
    not_first = pos != 0
    not_last = pos != (N - 1)

    def vec(i):                                     # (1, D) row of the table
        return vecs_ref[i:i + 1, :]

    def dwconv3(v, r):
        # zero-padded depthwise conv (k=3) along tokens via XLU rolls.
        # roll wraps across batch boundaries, but the edge masks zero exactly
        # those rows, reproducing Conv1d(padding=1) semantics per sequence.
        prev = jnp.where(not_first, pltpu.roll(v, shift=1, axis=0), 0.0)
        nxt = jnp.where(not_last, pltpu.roll(v, shift=M - 1, axis=0), 0.0)
        return vec(r) * prev + vec(r + 1) * v + vec(r + 2) * nxt + vec(r + 3)

    # Residual accumulator: every term is added as soon as it is produced so
    # its temporaries can die (small simultaneously-live (M, D) set).

    # ---- diffusion: delta_t*(conv(x) - x); delta_t folded into ROW_DC taps.
    y = x + dwconv3(x, ROW_DC)

    # ---- token mixer: LN -> dwconv -> GELU -> dwconv ----
    xn = _layernorm(x, vec(ROW_TNG), vec(ROW_TNB))
    y = y + dwconv3(_gelu_tanh(dwconv3(xn, ROW_T1)), ROW_T2)

    # ---- fused projections: x @ [lw1 | W_Q | W_K | W_V] (bf16 MXU, f32 acc);
    #      each slice of z is consumed immediately.
    z = jnp.dot(x.astype(bf16), w_in_ref[...], preferred_element_type=f32)

    # local update: per-token MLP
    h1 = _gelu_tanh(z[:, 0 * D:1 * D] + vec(ROW_LB1))
    y = y + jnp.dot(h1.astype(bf16), lw2_ref[...],
                    preferred_element_type=f32) + vec(ROW_LB2)

    # simple linear attention (full N per tile; contraction over N on the MXU)
    q = z[:, 1 * D:2 * D] + vec(ROW_BQ)
    k = z[:, 2 * D:3 * D] + vec(ROW_BK)
    Qp = jnp.where(q > 0, q + 1.0, jnp.exp(q)).reshape(Bt, N, D)   # elu(Q)+1
    Kp = jnp.where(k > 0, k + 1.0, jnp.exp(k)).reshape(Bt, N, D)   # elu(K)+1
    V = (z[:, 3 * D:4 * D] + vec(ROW_BV)).reshape(Bt, N, D)

    KV = jax.lax.dot_general(                        # (Bt, D, D)
        Kp.astype(bf16), V.astype(bf16),
        dimension_numbers=(((1,), (1,)), ((0,), (0,))),
        preferred_element_type=f32)
    k_sum = jnp.sum(Kp, axis=1, keepdims=True)       # (Bt, 1, D)
    # KV entries grow ~O(N): keep KV (and Q') in f32 for this contraction.
    num = jax.lax.dot_general(                       # (Bt, N, D)
        Qp, KV,
        dimension_numbers=(((2,), (1,)), ((0,), (0,))),
        preferred_element_type=f32)
    denom = jnp.sum(Qp * k_sum, axis=-1, keepdims=True)          # (Bt, N, 1)
    inv = pl.reciprocal(denom + 1e-6, approx=True)               # EUP slot
    y = y + (num * inv).reshape(M, D)

    # ---- norms + feed-forward ----
    y = _layernorm(y, vec(ROW_N1G), vec(ROW_N1B))
    h2 = _gelu_tanh(jnp.dot(y.astype(bf16), fw1_ref[...],
                            preferred_element_type=f32) + vec(ROW_FB1))
    y = y + jnp.dot(h2.astype(bf16), fw2_ref[...],
                    preferred_element_type=f32) + vec(ROW_FB2)
    y = _layernorm(y, vec(ROW_N2G), vec(ROW_N2B))

    # (optional) emit bf16 here if downstream allows; kept f32 for the check.
    o_ref[...] = y.reshape(Bt, N, D).astype(o_ref.dtype)


# ---------------------------------------------------------------------------
# generation-aware tiling policy
# ---------------------------------------------------------------------------
def _tpu_vmem_and_cores():
    """(VMEM capacity bytes, has-2-TensorCores?) with conservative fallbacks."""
    try:
        cap = int(pltpu.get_tpu_info().vmem_capacity_bytes)
    except Exception:
        cap = 64 * 1024 * 1024                    # v7x-sized worst case
    try:
        kind = jax.devices()[0].device_kind.lower()
    except Exception:
        kind = ""
    two_tc = ("v4" in kind) or ("v5p" in kind) or ("7" in kind)
    return cap, two_tc


def _per_step_bytes(bt, N, D, weight_bytes):
    act = bt * N * D * 4                 # one (Bt*N, D) f32 tensor
    io = 2 * (2 * act)                   # double-buffered f32 x / out tiles
    live = 12 * act                      # ~8 live (M,D) f32 + one (M,4D) z
    attn = 2 * bt * D * D * 4            # per-batch (D, D) KV (+ slack)
    return io + live + attn + weight_bytes


def _pick_batch_tile(B, N, D, vmem_cap, two_tc, weight_bytes):
    """Largest Bt dividing B whose working set fits ~70% of this chip's VMEM.
    On 2-TensorCore chips keep >= 2 grid steps so the 'parallel' axis can be
    split across cores; on 1-TC chips prefer the single biggest tile (tall M
    per MXU matmul beats extra pipeline steps for this compute-bound body)."""
    budget = int(0.70 * vmem_cap)
    best = 1
    for bt in range(1, B + 1):
        if B % bt:
            continue
        if two_tc and B > 1 and (B // bt) < 2:
            continue
        if _per_step_bytes(bt, N, D, weight_bytes) <= budget:
            best = bt
    return best


# ---------------------------------------------------------------------------
# wrapper
# ---------------------------------------------------------------------------
def diffurnn_forward(x, packed, *, batch_tile=None):
    vecs, w_in, lw2, fw1, fw2 = packed
    B, N, D = x.shape
    assert D % 128 == 0 and N % 8 == 0, "lane/sublane-dense shapes expected"

    vmem_cap, two_tc = _tpu_vmem_and_cores()
    weight_bytes = ((w_in.size + lw2.size + fw1.size + fw2.size) * 2
                    + vecs.size * 4)
    bt = batch_tile or _pick_batch_tile(B, N, D, vmem_cap, two_tc, weight_bytes)
    assert B % bt == 0, "batch must be divisible by the batch tile"
    grid = (B // bt,)

    est = _per_step_bytes(bt, N, D, weight_bytes)
    vmem_limit = int(min(max(3 * est, 32 * 1024 * 1024), int(0.75 * vmem_cap)))

    # weights / packed vectors: whole-array single-copy VMEM residents
    # (no per-step re-DMA, no double buffering).
    def vmem_whole():
        return pl.BlockSpec(memory_space=pltpu.MemorySpace.VMEM)

    matmul_flops = 2 * B * N * D * D * 9      # fused proj(=4) + 3 DxD + KV + num
    cost = pl.CostEstimate(
        flops=int(matmul_flops + 40 * B * N * D),
        transcendentals=int(6 * B * N * D),
        bytes_accessed=int(2 * B * N * D * 4 + weight_bytes))

    return pl.pallas_call(
        diffurnn_kernel,
        out_shape=jax.ShapeDtypeStruct((B, N, D), jnp.float32),
        grid_spec=pltpu.PrefetchScalarGridSpec(
            num_scalar_prefetch=0,
            grid=grid,
            in_specs=[pl.BlockSpec((bt, N, D), lambda b: (b, 0, 0)),
                      vmem_whole(), vmem_whole(), vmem_whole(),
                      vmem_whole(), vmem_whole()],
            out_specs=pl.BlockSpec((bt, N, D), lambda b: (b, 0, 0)),
        ),
        compiler_params=pltpu.CompilerParams(
            dimension_semantics=("parallel",),
            vmem_limit_bytes=vmem_limit),
        cost_estimate=cost,
    )(x, vecs, w_in, lw2, fw1, fw2)


# ---------------------------------------------------------------------------
# deterministic parameter init (synthetic; shapes follow the nn.Module)
# ---------------------------------------------------------------------------
def init_params(key, D):
    ks = iter(jax.random.split(key, 20))

    def nrm(shape, scale):
        return (scale * jax.random.normal(next(ks), shape)).astype(jnp.float32)

    ones = jnp.ones((D,), jnp.float32)
    zeros = jnp.zeros((D,), jnp.float32)
    return dict(
        delta_t=jnp.float32(0.1),
        dc_w=nrm((D, 3), 0.3), dc_b=nrm((D,), 0.05),
        lw1=nrm((D, D), 0.1), lb1=nrm((D,), 0.02),
        lw2=nrm((D, D), 0.1), lb2=nrm((D,), 0.02),
        tn_g=ones, tn_b=zeros,
        t1_w=nrm((D, 3), 0.3), t1_b=nrm((D,), 0.05),
        t2_w=nrm((D, 3), 0.3), t2_b=nrm((D,), 0.05),
        wq=nrm((D, D), 0.1), bq=nrm((D,), 0.02),
        wk=nrm((D, D), 0.1), bk=nrm((D,), 0.02),
        wv=nrm((D, D), 0.1), bv=nrm((D,), 0.02),
        fw1=nrm((D, D), 0.1), fb1=nrm((D,), 0.02),
        fw2=nrm((D, D), 0.1), fb2=nrm((D,), 0.02),
        n1_g=ones, n1_b=zeros, n2_g=ones, n2_b=zeros,
    )


def pack_params(p, D):
    """Pack module parameters into the kernel's input layout."""
    rows = [jnp.zeros((1, D), jnp.float32)] * NUM_VEC_ROWS

    def put(i, v):
        rows[i] = jnp.asarray(v, jnp.float32).reshape(1, D)

    # fold delta_t*(conv(x) - x) into the diffusion taps: center tap becomes
    # delta_t*(w1 - 1); the other taps and the bias are scaled by delta_t.
    dt = jnp.asarray(p["delta_t"], jnp.float32)
    put(ROW_DC + 0, dt * p["dc_w"][:, 0])
    put(ROW_DC + 1, dt * (p["dc_w"][:, 1] - 1.0))
    put(ROW_DC + 2, dt * p["dc_w"][:, 2])
    put(ROW_DC + 3, dt * p["dc_b"])

    for base, w, b in ((ROW_T1, p["t1_w"], p["t1_b"]),
                       (ROW_T2, p["t2_w"], p["t2_b"])):
        put(base + 0, w[:, 0]); put(base + 1, w[:, 1])
        put(base + 2, w[:, 2]); put(base + 3, b)
    put(ROW_LB1, p["lb1"]); put(ROW_LB2, p["lb2"])
    put(ROW_TNG, p["tn_g"]); put(ROW_TNB, p["tn_b"])
    put(ROW_BQ, p["bq"]); put(ROW_BK, p["bk"]); put(ROW_BV, p["bv"])
    put(ROW_FB1, p["fb1"]); put(ROW_FB2, p["fb2"])
    put(ROW_N1G, p["n1_g"]); put(ROW_N1B, p["n1_b"])
    put(ROW_N2G, p["n2_g"]); put(ROW_N2B, p["n2_b"])
    vecs = jnp.concatenate(rows, axis=0)                         # (32, D) f32

    w_in = jnp.concatenate([p["lw1"], p["wq"], p["wk"], p["wv"]],
                           axis=1).astype(jnp.bfloat16)          # (D, 4D)
    return (vecs, w_in, p["lw2"].astype(jnp.bfloat16),
            p["fw1"].astype(jnp.bfloat16), p["fw2"].astype(jnp.bfloat16))


# ---------------------------------------------------------------------------
# pure-JAX f32 reference (mirrors the PyTorch forward, erf GELU)
# ---------------------------------------------------------------------------
def reference_forward(x, p):
    def dwconv(v, w, b):          # v: [B, N, D]; zero-padded k=3 conv over N
        prev = jnp.pad(v, ((0, 0), (1, 0), (0, 0)))[:, :-1]
        nxt = jnp.pad(v, ((0, 0), (0, 1), (0, 0)))[:, 1:]
        return w[:, 0] * prev + w[:, 1] * v + w[:, 2] * nxt + b

    x_conv = dwconv(x, p["dc_w"], p["dc_b"])
    diff = p["delta_t"] * (x_conv - x)
    local = _gelu_exact(x @ p["lw1"] + p["lb1"]) @ p["lw2"] + p["lb2"]
    xn = _layernorm(x, p["tn_g"], p["tn_b"])
    token = dwconv(_gelu_exact(dwconv(xn, p["t1_w"], p["t1_b"])),
                   p["t2_w"], p["t2_b"])
    Q = x @ p["wq"] + p["bq"]
    K = x @ p["wk"] + p["bk"]
    V = x @ p["wv"] + p["bv"]
    Qp = jnp.where(Q > 0, Q + 1.0, jnp.exp(Q))
    Kp = jnp.where(K > 0, K + 1.0, jnp.exp(K))
    KV = jnp.einsum('bnd,bne->bde', Kp, V)
    num = jnp.einsum('bnd,bde->bne', Qp, KV)
    Ksum = Kp.sum(axis=1)
    nrm = jnp.einsum('bnd,bd->bn', Qp, Ksum)[..., None]
    attn = num / (nrm + 1e-6)

    y = x + diff + local + token + attn
    y = _layernorm(y, p["n1_g"], p["n1_b"])
    y = y + (_gelu_exact(y @ p["fw1"] + p["fb1"]) @ p["fw2"] + p["fb2"])
    y = _layernorm(y, p["n2_g"], p["n2_b"])
    return y


if __name__ == "__main__":
    # small but lane-dense shapes: D multiple of 128, N multiple of 8.
    B, N, D = 4, 16, 128
    key = jax.random.PRNGKey(0)
    kx, kp = jax.random.split(key)
    x = jax.random.normal(kx, (B, N, D), dtype=jnp.float32)
    params = init_params(kp, D)
    packed = pack_params(params, D)

    out = diffurnn_forward(x, packed)
    jax.block_until_ready(out)

    # bf16 matmul operands (f32 accumulation) + tanh-GELU + approx reciprocal
    # vs a pure-f32 erf-GELU reference -> 2e-2 tolerance.
    ref = reference_forward(x, params)
    np.testing.assert_allclose(np.asarray(out), np.asarray(ref),
                               rtol=2e-2, atol=2e-2)
    print("KERNEL_OK")
</pallas_src>

<mosaic_0001>
module attributes {stable_mosaic.version = 11 : i64} {
  func.func @diffurnn_kernel(%arg0: i32, %arg1: memref<4x16x128xf32, #tpu.memory_space<vmem>>, %arg2: memref<32x128xf32, #tpu.memory_space<vmem>>, %arg3: memref<128x512xbf16, #tpu.memory_space<vmem>>, %arg4: memref<128x128xbf16, #tpu.memory_space<vmem>>, %arg5: memref<128x128xbf16, #tpu.memory_space<vmem>>, %arg6: memref<128x128xbf16, #tpu.memory_space<vmem>>, %arg7: memref<4x16x128xf32, #tpu.memory_space<vmem>>) attributes {dimension_semantics = [#tpu.dimension_semantics<parallel>], iteration_bounds = array<i64: 1>, scalar_prefetch = 0 : i64, scratch_operands = 0 : i64, tpu.core_type = #tpu.core_type<tc>, window_params = [{transform_indices = @transform_0, window_bounds = array<i64: 4, 16, 128>}, {pipeline_mode = #tpu.pipeline_mode<synchronous>, transform_indices = @transform_1, window_bounds = array<i64: 32, 128>}, {pipeline_mode = #tpu.pipeline_mode<synchronous>, transform_indices = @transform_2, window_bounds = array<i64: 128, 512>}, {pipeline_mode = #tpu.pipeline_mode<synchronous>, transform_indices = @transform_3, window_bounds = array<i64: 128, 128>}, {pipeline_mode = #tpu.pipeline_mode<synchronous>, transform_indices = @transform_4, window_bounds = array<i64: 128, 128>}, {pipeline_mode = #tpu.pipeline_mode<synchronous>, transform_indices = @transform_5, window_bounds = array<i64: 128, 128>}, {transform_indices = @transform_6, window_bounds = array<i64: 4, 16, 128>}]} {
    %c0 = arith.constant 0 : index
    %c0_0 = arith.constant 0 : index
    %c0_1 = arith.constant 0 : index
    %0 = vector.load %arg1[%c0, %c0_0, %c0_1] : memref<4x16x128xf32, #tpu.memory_space<vmem>>, vector<4x16x128xf32>
    %1 = vector.shape_cast %0 : vector<4x16x128xf32> to vector<64x128xf32>
    %2 = tpu.iota {dimensions = array<i32: 0>} : vector<64x1xi32>
    %c16_i32 = arith.constant 16 : i32
    %3 = vector.broadcast %c16_i32 : i32 to vector<64x1xi32>
    %4 = arith.remsi %2, %3 : vector<64x1xi32>
    %c0_i32 = arith.constant 0 : i32
    %5 = vector.broadcast %c0_i32 : i32 to vector<64x1xi32>
    %6 = arith.cmpi ne, %4, %5 : vector<64x1xi32>
    %c15_i32 = arith.constant 15 : i32
    %7 = vector.broadcast %c15_i32 : i32 to vector<64x1xi32>
    %8 = arith.cmpi ne, %4, %7 : vector<64x1xi32>
    %c1_i32 = arith.constant 1 : i32
    %9 = tpu.dynamic_rotate %1 by %c1_i32 dim 0 : vector<64x128xf32>, i32 -> vector<64x128xf32>
    %cst = arith.constant 0.000000e+00 : f32
    %10 = vector.shape_cast %6 : vector<64x1xi1> to vector<64x1xi1>
    %11 = vector.broadcast %10 : vector<64x1xi1> to vector<64x128xi1>
    %12 = vector.broadcast %cst : f32 to vector<64x128xf32>
    %13 = arith.select %11, %9, %12 : vector<64x128xi1>, vector<64x128xf32>
    %c63_i32 = arith.constant 63 : i32
    %14 = tpu.dynamic_rotate %1 by %c63_i32 dim 0 : vector<64x128xf32>, i32 -> vector<64x128xf32>
    %cst_2 = arith.constant 0.000000e+00 : f32
    %15 = vector.shape_cast %8 : vector<64x1xi1> to vector<64x1xi1>
    %16 = vector.broadcast %15 : vector<64x1xi1> to vector<64x128xi1>
    %17 = vector.broadcast %cst_2 : f32 to vector<64x128xf32>
    %18 = arith.select %16, %14, %17 : vector<64x128xi1>, vector<64x128xf32>
    %c0_3 = arith.constant 0 : index
    %c0_4 = arith.constant 0 : index
    %19 = vector.load %arg2[%c0_3, %c0_4] : memref<32x128xf32, #tpu.memory_space<vmem>>, vector<1x128xf32>
    %20 = vector.broadcast %19 : vector<1x128xf32> to vector<64x128xf32>
    %21 = arith.mulf %20, %13 : vector<64x128xf32>
    %c1 = arith.constant 1 : index
    %c0_5 = arith.constant 0 : index
    %22 = vector.load %arg2[%c1, %c0_5] : memref<32x128xf32, #tpu.memory_space<vmem>>, vector<1x128xf32>
    %23 = vector.broadcast %22 : vector<1x128xf32> to vector<64x128xf32>
    %24 = arith.mulf %23, %1 : vector<64x128xf32>
    %25 = arith.addf %21, %24 : vector<64x128xf32>
    %c2 = arith.constant 2 : index
    %c0_6 = arith.constant 0 : index
    %26 = vector.load %arg2[%c2, %c0_6] : memref<32x128xf32, #tpu.memory_space<vmem>>, vector<1x128xf32>
    %27 = vector.broadcast %26 : vector<1x128xf32> to vector<64x128xf32>
    %28 = arith.mulf %27, %18 : vector<64x128xf32>
    %29 = arith.addf %25, %28 : vector<64x128xf32>
    %c3 = arith.constant 3 : index
    %c0_7 = arith.constant 0 : index
    %30 = vector.load %arg2[%c3, %c0_7] : memref<32x128xf32, #tpu.memory_space<vmem>>, vector<1x128xf32>
    %31 = vector.broadcast %30 : vector<1x128xf32> to vector<64x128xf32>
    %32 = arith.addf %29, %31 : vector<64x128xf32>
    %33 = arith.addf %1, %32 : vector<64x128xf32>
    %c6 = arith.constant 6 : index
    %c0_8 = arith.constant 0 : index
    %34 = vector.load %arg2[%c6, %c0_8] : memref<32x128xf32, #tpu.memory_space<vmem>>, vector<1x128xf32>
    %c7 = arith.constant 7 : index
    %c0_9 = arith.constant 0 : index
    %35 = vector.load %arg2[%c7, %c0_9] : memref<32x128xf32, #tpu.memory_space<vmem>>, vector<1x128xf32>
    %cst_10 = arith.constant dense<0.000000e+00> : vector<64xf32>
    %36 = vector.multi_reduction <add>, %1, %cst_10 [1] : vector<64x128xf32> to vector<64xf32>
    %37 = vector.shape_cast %36 : vector<64xf32> to vector<64x1xf32>
    %cst_11 = arith.constant 1.280000e+02 : f32
    %38 = vector.broadcast %cst_11 : f32 to vector<64x1xf32>
    %39 = arith.divf %37, %38 : vector<64x1xf32>
    %40 = vector.broadcast %39 : vector<64x1xf32> to vector<64x128xf32>
    %41 = arith.subf %1, %40 : vector<64x128xf32>
    %42 = arith.mulf %41, %41 : vector<64x128xf32>
    %cst_12 = arith.constant dense<0.000000e+00> : vector<64xf32>
    %43 = vector.multi_reduction <add>, %42, %cst_12 [1] : vector<64x128xf32> to vector<64xf32>
    %44 = vector.shape_cast %43 : vector<64xf32> to vector<64x1xf32>
    %cst_13 = arith.constant 1.280000e+02 : f32
    %45 = vector.broadcast %cst_13 : f32 to vector<64x1xf32>
    %46 = arith.divf %44, %45 : vector<64x1xf32>
    %47 = vector.broadcast %39 : vector<64x1xf32> to vector<64x128xf32>
    %48 = arith.subf %1, %47 : vector<64x128xf32>
    %cst_14 = arith.constant 9.99999974E-6 : f32
    %49 = vector.broadcast %cst_14 : f32 to vector<64x1xf32>
    %50 = arith.addf %46, %49 : vector<64x1xf32>
    %51 = math.rsqrt %50 : vector<64x1xf32>
    %52 = vector.broadcast %51 : vector<64x1xf32> to vector<64x128xf32>
    %53 = arith.mulf %48, %52 : vector<64x128xf32>
    %54 = vector.broadcast %34 : vector<1x128xf32> to vector<64x128xf32>
    %55 = arith.mulf %53, %54 : vector<64x128xf32>
    %56 = vector.broadcast %35 : vector<1x128xf32> to vector<64x128xf32>
    %57 = arith.addf %55, %56 : vector<64x128xf32>
    %c1_i32_15 = arith.constant 1 : i32
    %58 = tpu.dynamic_rotate %57 by %c1_i32_15 dim 0 : vector<64x128xf32>, i32 -> vector<64x128xf32>
    %cst_16 = arith.constant 0.000000e+00 : f32
    %59 = vector.shape_cast %6 : vector<64x1xi1> to vector<64x1xi1>
    %60 = vector.broadcast %59 : vector<64x1xi1> to vector<64x128xi1>
    %61 = vector.broadcast %cst_16 : f32 to vector<64x128xf32>
    %62 = arith.select %60, %58, %61 : vector<64x128xi1>, vector<64x128xf32>
    %c63_i32_17 = arith.constant 63 : i32
    %63 = tpu.dynamic_rotate %57 by %c63_i32_17 dim 0 : vector<64x128xf32>, i32 -> vector<64x128xf32>
    %cst_18 = arith.constant 0.000000e+00 : f32
    %64 = vector.shape_cast %8 : vector<64x1xi1> to vector<64x1xi1>
    %65 = vector.broadcast %64 : vector<64x1xi1> to vector<64x128xi1>
    %66 = vector.broadcast %cst_18 : f32 to vector<64x128xf32>
    %67 = arith.select %65, %63, %66 : vector<64x128xi1>, vector<64x128xf32>
    %c8 = arith.constant 8 : index
    %c0_19 = arith.constant 0 : index
    %68 = vector.load %arg2[%c8, %c0_19] : memref<32x128xf32, #tpu.memory_space<vmem>>, vector<1x128xf32>
    %69 = vector.broadcast %68 : vector<1x128xf32> to vector<64x128xf32>
    %70 = arith.mulf %69, %62 : vector<64x128xf32>
    %c9 = arith.constant 9 : index
    %c0_20 = arith.constant 0 : index
    %71 = vector.load %arg2[%c9, %c0_20] : memref<32x128xf32, #tpu.memory_space<vmem>>, vector<1x128xf32>
    %72 = vector.broadcast %71 : vector<1x128xf32> to vector<64x128xf32>
    %73 = arith.mulf %72, %57 : vector<64x128xf32>
    %74 = arith.addf %70, %73 : vector<64x128xf32>
    %c10 = arith.constant 10 : index
    %c0_21 = arith.constant 0 : index
    %75 = vector.load %arg2[%c10, %c0_21] : memref<32x128xf32, #tpu.memory_space<vmem>>, vector<1x128xf32>
    %76 = vector.broadcast %75 : vector<1x128xf32> to vector<64x128xf32>
    %77 = arith.mulf %76, %67 : vector<64x128xf32>
    %78 = arith.addf %74, %77 : vector<64x128xf32>
    %c11 = arith.constant 11 : index
    %c0_22 = arith.constant 0 : index
    %79 = vector.load %arg2[%c11, %c0_22] : memref<32x128xf32, #tpu.memory_space<vmem>>, vector<1x128xf32>
    %80 = vector.broadcast %79 : vector<1x128xf32> to vector<64x128xf32>
    %81 = arith.addf %78, %80 : vector<64x128xf32>
    %cst_23 = arith.constant 5.000000e-01 : f32
    %82 = vector.broadcast %cst_23 : f32 to vector<64x128xf32>
    %83 = arith.mulf %82, %81 : vector<64x128xf32>
    %cst_24 = arith.constant 4.471500e-02 : f32
    %84 = vector.broadcast %cst_24 : f32 to vector<64x128xf32>
    %85 = arith.mulf %84, %81 : vector<64x128xf32>
    %86 = arith.mulf %85, %81 : vector<64x128xf32>
    %87 = arith.mulf %86, %81 : vector<64x128xf32>
    %88 = arith.addf %81, %87 : vector<64x128xf32>
    %cst_25 = arith.constant 0.797884583 : f32
    %89 = vector.broadcast %cst_25 : f32 to vector<64x128xf32>
    %90 = arith.mulf %89, %88 : vector<64x128xf32>
    %91 = math.tanh %90 : vector<64x128xf32>
    %cst_26 = arith.constant 1.000000e+00 : f32
    %92 = vector.broadcast %cst_26 : f32 to vector<64x128xf32>
    %93 = arith.addf %92, %91 : vector<64x128xf32>
    %94 = arith.mulf %83, %93 : vector<64x128xf32>
    %c1_i32_27 = arith.constant 1 : i32
    %95 = tpu.dynamic_rotate %94 by %c1_i32_27 dim 0 : vector<64x128xf32>, i32 -> vector<64x128xf32>
    %cst_28 = arith.constant 0.000000e+00 : f32
    %96 = vector.shape_cast %6 : vector<64x1xi1> to vector<64x1xi1>
    %97 = vector.broadcast %96 : vector<64x1xi1> to vector<64x128xi1>
    %98 = vector.broadcast %cst_28 : f32 to vector<64x128xf32>
    %99 = arith.select %97, %95, %98 : vector<64x128xi1>, vector<64x128xf32>
    %c63_i32_29 = arith.constant 63 : i32
    %100 = tpu.dynamic_rotate %94 by %c63_i32_29 dim 0 : vector<64x128xf32>, i32 -> vector<64x128xf32>
    %cst_30 = arith.constant 0.000000e+00 : f32
    %101 = vector.shape_cast %8 : vector<64x1xi1> to vector<64x1xi1>
    %102 = vector.broadcast %101 : vector<64x1xi1> to vector<64x128xi1>
    %103 = vector.broadcast %cst_30 : f32 to vector<64x128xf32>
    %104 = arith.select %102, %100, %103 : vector<64x128xi1>, vector<64x128xf32>
    %c12 = arith.constant 12 : index
    %c0_31 = arith.constant 0 : index
    %105 = vector.load %arg2[%c12, %c0_31] : memref<32x128xf32, #tpu.memory_space<vmem>>, vector<1x128xf32>
    %106 = vector.broadcast %105 : vector<1x128xf32> to vector<64x128xf32>
    %107 = arith.mulf %106, %99 : vector<64x128xf32>
    %c13 = arith.constant 13 : index
    %c0_32 = arith.constant 0 : index
    %108 = vector.load %arg2[%c13, %c0_32] : memref<32x128xf32, #tpu.memory_space<vmem>>, vector<1x128xf32>
    %109 = vector.broadcast %108 : vector<1x128xf32> to vector<64x128xf32>
    %110 = arith.mulf %109, %94 : vector<64x128xf32>
    %111 = arith.addf %107, %110 : vector<64x128xf32>
    %c14 = arith.constant 14 : index
    %c0_33 = arith.constant 0 : index
    %112 = vector.load %arg2[%c14, %c0_33] : memref<32x128xf32, #tpu.memory_space<vmem>>, vector<1x128xf32>
    %113 = vector.broadcast %112 : vector<1x128xf32> to vector<64x128xf32>
    %114 = arith.mulf %113, %104 : vector<64x128xf32>
    %115 = arith.addf %111, %114 : vector<64x128xf32>
    %c15 = arith.constant 15 : index
    %c0_34 = arith.constant 0 : index
    %116 = vector.load %arg2[%c15, %c0_34] : memref<32x128xf32, #tpu.memory_space<vmem>>, vector<1x128xf32>
    %117 = vector.broadcast %116 : vector<1x128xf32> to vector<64x128xf32>
    %118 = arith.addf %115, %117 : vector<64x128xf32>
    %119 = arith.addf %33, %118 : vector<64x128xf32>
    %120 = arith.truncf %1 : vector<64x128xf32> to vector<64x128xbf16>
    %c0_35 = arith.constant 0 : index
    %c0_36 = arith.constant 0 : index
    %121 = vector.load %arg3[%c0_35, %c0_36] : memref<128x512xbf16, #tpu.memory_space<vmem>>, vector<128x512xbf16>
    %cst_37 = arith.constant dense<0.000000e+00> : vector<64x512xf32>
    %122 = tpu.matmul %120, %121, %cst_37 {dimension_numbers = #tpu.dot_dimension_numbers<[1], [0], [0], [1], [0, 0, 1, 1], [], []>} : vector<64x128xbf16>, vector<128x512xbf16>, vector<64x512xf32> -> vector<64x512xf32>
    %123 = vector.extract_strided_slice %122 {offsets = [0, 0], sizes = [64, 128], strides = [1, 1]} : vector<64x512xf32> to vector<64x128xf32>
    %c4 = arith.constant 4 : index
    %c0_38 = arith.constant 0 : index
    %124 = vector.load %arg2[%c4, %c0_38] : memref<32x128xf32, #tpu.memory_space<vmem>>, vector<1x128xf32>
    %125 = vector.broadcast %124 : vector<1x128xf32> to vector<64x128xf32>
    %126 = arith.addf %123, %125 : vector<64x128xf32>
    %cst_39 = arith.constant 5.000000e-01 : f32
    %127 = vector.broadcast %cst_39 : f32 to vector<64x128xf32>
    %128 = arith.mulf %127, %126 : vector<64x128xf32>
    %cst_40 = arith.constant 4.471500e-02 : f32
    %129 = vector.broadcast %cst_40 : f32 to vector<64x128xf32>
    %130 = arith.mulf %129, %126 : vector<64x128xf32>
    %131 = arith.mulf %130, %126 : vector<64x128xf32>
    %132 = arith.mulf %131, %126 : vector<64x128xf32>
    %133 = arith.addf %126, %132 : vector<64x128xf32>
    %cst_41 = arith.constant 0.797884583 : f32
    %134 = vector.broadcast %cst_41 : f32 to vector<64x128xf32>
    %135 = arith.mulf %134, %133 : vector<64x128xf32>
    %136 = math.tanh %135 : vector<64x128xf32>
    %cst_42 = arith.constant 1.000000e+00 : f32
    %137 = vector.broadcast %cst_42 : f32 to vector<64x128xf32>
    %138 = arith.addf %137, %136 : vector<64x128xf32>
    %139 = arith.mulf %128, %138 : vector<64x128xf32>
    %140 = arith.truncf %139 : vector<64x128xf32> to vector<64x128xbf16>
    %c0_43 = arith.constant 0 : index
    %c0_44 = arith.constant 0 : index
    %141 = vector.load %arg4[%c0_43, %c0_44] : memref<128x128xbf16, #tpu.memory_space<vmem>>, vector<128x128xbf16>
    %cst_45 = arith.constant dense<0.000000e+00> : vector<64x128xf32>
    %142 = tpu.matmul %140, %141, %cst_45 {dimension_numbers = #tpu.dot_dimension_numbers<[1], [0], [0], [1], [0, 0, 1, 1], [], []>} : vector<64x128xbf16>, vector<128x128xbf16>, vector<64x128xf32> -> vector<64x128xf32>
    %143 = arith.addf %119, %142 : vector<64x128xf32>
    %c5 = arith.constant 5 : index
    %c0_46 = arith.constant 0 : index
    %144 = vector.load %arg2[%c5, %c0_46] : memref<32x128xf32, #tpu.memory_space<vmem>>, vector<1x128xf32>
    %145 = vector.broadcast %144 : vector<1x128xf32> to vector<64x128xf32>
    %146 = arith.addf %143, %145 : vector<64x128xf32>
    %147 = vector.extract_strided_slice %122 {offsets = [0, 128], sizes = [64, 128], strides = [1, 1]} : vector<64x512xf32> to vector<64x128xf32>
    %c16 = arith.constant 16 : index
    %c0_47 = arith.constant 0 : index
    %148 = vector.load %arg2[%c16, %c0_47] : memref<32x128xf32, #tpu.memory_space<vmem>>, vector<1x128xf32>
    %149 = vector.broadcast %148 : vector<1x128xf32> to vector<64x128xf32>
    %150 = arith.addf %147, %149 : vector<64x128xf32>
    %151 = vector.extract_strided_slice %122 {offsets = [0, 256], sizes = [64, 128], strides = [1, 1]} : vector<64x512xf32> to vector<64x128xf32>
    %c17 = arith.constant 17 : index
    %c0_48 = arith.constant 0 : index
    %152 = vector.load %arg2[%c17, %c0_48] : memref<32x128xf32, #tpu.memory_space<vmem>>, vector<1x128xf32>
    %153 = vector.broadcast %152 : vector<1x128xf32> to vector<64x128xf32>
    %154 = arith.addf %151, %153 : vector<64x128xf32>
    %cst_49 = arith.constant 0.000000e+00 : f32
    %155 = vector.broadcast %cst_49 : f32 to vector<64x128xf32>
    %156 = arith.cmpf ogt, %150, %155 : vector<64x128xf32>
    %cst_50 = arith.constant 1.000000e+00 : f32
    %157 = vector.broadcast %cst_50 : f32 to vector<64x128xf32>
    %158 = arith.addf %150, %157 : vector<64x128xf32>
    %159 = math.exp %150 : vector<64x128xf32>
    %160 = arith.select %156, %158, %159 : vector<64x128xi1>, vector<64x128xf32>
    %161 = vector.shape_cast %160 : vector<64x128xf32> to vector<4x16x128xf32>
    %cst_51 = arith.constant 0.000000e+00 : f32
    %162 = vector.broadcast %cst_51 : f32 to vector<64x128xf32>
    %163 = arith.cmpf ogt, %154, %162 : vector<64x128xf32>
    %cst_52 = arith.constant 1.000000e+00 : f32
    %164 = vector.broadcast %cst_52 : f32 to vector<64x128xf32>
    %165 = arith.addf %154, %164 : vector<64x128xf32>
    %166 = math.exp %154 : vector<64x128xf32>
    %167 = arith.select %163, %165, %166 : vector<64x128xi1>, vector<64x128xf32>
    %168 = vector.shape_cast %167 : vector<64x128xf32> to vector<4x16x128xf32>
    %169 = vector.extract_strided_slice %122 {offsets = [0, 384], sizes = [64, 128], strides = [1, 1]} : vector<64x512xf32> to vector<64x128xf32>
    %c18 = arith.constant 18 : index
    %c0_53 = arith.constant 0 : index
    %170 = vector.load %arg2[%c18, %c0_53] : memref<32x128xf32, #tpu.memory_space<vmem>>, vector<1x128xf32>
    %171 = vector.broadcast %170 : vector<1x128xf32> to vector<64x128xf32>
    %172 = arith.addf %169, %171 : vector<64x128xf32>
    %173 = vector.shape_cast %172 : vector<64x128xf32> to vector<4x16x128xf32>
    %174 = arith.truncf %168 : vector<4x16x128xf32> to vector<4x16x128xbf16>
    %175 = arith.truncf %173 : vector<4x16x128xf32> to vector<4x16x128xbf16>
    %cst_54 = arith.constant dense<0.000000e+00> : vector<4x128x128xf32>
    %176 = tpu.matmul %174, %175, %cst_54 {dimension_numbers = #tpu.dot_dimension_numbers<[1], [1], [2], [2], [0, 0, 0, 2, 1, 2], [0], [0]>} : vector<4x16x128xbf16>, vector<4x16x128xbf16>, vector<4x128x128xf32> -> vector<4x128x128xf32>
    %cst_55 = arith.constant dense<0.000000e+00> : vector<4x128xf32>
    %177 = vector.multi_reduction <add>, %168, %cst_55 [1] : vector<4x16x128xf32> to vector<4x128xf32>
    %178 = vector.shape_cast %177 : vector<4x128xf32> to vector<4x1x128xf32>
    %cst_56 = arith.constant dense<0.000000e+00> : vector<4x16x128xf32>
    %179 = tpu.matmul %161, %176, %cst_56 {dimension_numbers = #tpu.dot_dimension_numbers<[2], [1], [1], [2], [0, 0, 0, 1, 1, 2], [0], [0]>} : vector<4x16x128xf32>, vector<4x128x128xf32>, vector<4x16x128xf32> -> vector<4x16x128xf32>
    %180 = vector.broadcast %178 : vector<4x1x128xf32> to vector<4x16x128xf32>
    %181 = arith.mulf %161, %180 : vector<4x16x128xf32>
    %cst_57 = arith.constant dense<0.000000e+00> : vector<4x16xf32>
    %182 = vector.multi_reduction <add>, %181, %cst_57 [2] : vector<4x16x128xf32> to vector<4x16xf32>
    %183 = vector.shape_cast %182 : vector<4x16xf32> to vector<4x16x1xf32>
    %cst_58 = arith.constant 9.99999997E-7 : f32
    %184 = vector.broadcast %cst_58 : f32 to vector<4x16x1xf32>
    %185 = arith.addf %183, %184 : vector<4x16x1xf32>
    %186 = tpu.reciprocal %185 {approx = true} : vector<4x16x1xf32> -> vector<4x16x1xf32>
    %187 = vector.broadcast %186 : vector<4x16x1xf32> to vector<4x16x128xf32>
    %188 = arith.mulf %179, %187 : vector<4x16x128xf32>
    %189 = vector.shape_cast %188 : vector<4x16x128xf32> to vector<64x128xf32>
    %190 = arith.addf %146, %189 : vector<64x128xf32>
    %c21 = arith.constant 21 : index
    %c0_59 = arith.constant 0 : index
    %191 = vector.load %arg2[%c21, %c0_59] : memref<32x128xf32, #tpu.memory_space<vmem>>, vector<1x128xf32>
    %c22 = arith.constant 22 : index
    %c0_60 = arith.constant 0 : index
    %192 = vector.load %arg2[%c22, %c0_60] : memref<32x128xf32, #tpu.memory_space<vmem>>, vector<1x128xf32>
    %cst_61 = arith.constant dense<0.000000e+00> : vector<64xf32>
    %193 = vector.multi_reduction <add>, %190, %cst_61 [1] : vector<64x128xf32> to vector<64xf32>
    %194 = vector.shape_cast %193 : vector<64xf32> to vector<64x1xf32>
    %cst_62 = arith.constant 1.280000e+02 : f32
    %195 = vector.broadcast %cst_62 : f32 to vector<64x1xf32>
    %196 = arith.divf %194, %195 : vector<64x1xf32>
    %197 = vector.broadcast %196 : vector<64x1xf32> to vector<64x128xf32>
    %198 = arith.subf %190, %197 : vector<64x128xf32>
    %199 = arith.mulf %198, %198 : vector<64x128xf32>
    %cst_63 = arith.constant dense<0.000000e+00> : vector<64xf32>
    %200 = vector.multi_reduction <add>, %199, %cst_63 [1] : vector<64x128xf32> to vector<64xf32>
    %201 = vector.shape_cast %200 : vector<64xf32> to vector<64x1xf32>
    %cst_64 = arith.constant 1.280000e+02 : f32
    %202 = vector.broadcast %cst_64 : f32 to vector<64x1xf32>
    %203 = arith.divf %201, %202 : vector<64x1xf32>
    %204 = vector.broadcast %196 : vector<64x1xf32> to vector<64x128xf32>
    %205 = arith.subf %190, %204 : vector<64x128xf32>
    %cst_65 = arith.constant 9.99999974E-6 : f32
    %206 = vector.broadcast %cst_65 : f32 to vector<64x1xf32>
    %207 = arith.addf %203, %206 : vector<64x1xf32>
    %208 = math.rsqrt %207 : vector<64x1xf32>
    %209 = vector.broadcast %208 : vector<64x1xf32> to vector<64x128xf32>
    %210 = arith.mulf %205, %209 : vector<64x128xf32>
    %211 = vector.broadcast %191 : vector<1x128xf32> to vector<64x128xf32>
    %212 = arith.mulf %210, %211 : vector<64x128xf32>
    %213 = vector.broadcast %192 : vector<1x128xf32> to vector<64x128xf32>
    %214 = arith.addf %212, %213 : vector<64x128xf32>
    %215 = arith.truncf %214 : vector<64x128xf32> to vector<64x128xbf16>
    %c0_66 = arith.constant 0 : index
    %c0_67 = arith.constant 0 : index
    %216 = vector.load %arg5[%c0_66, %c0_67] : memref<128x128xbf16, #tpu.memory_space<vmem>>, vector<128x128xbf16>
    %cst_68 = arith.constant dense<0.000000e+00> : vector<64x128xf32>
    %217 = tpu.matmul %215, %216, %cst_68 {dimension_numbers = #tpu.dot_dimension_numbers<[1], [0], [0], [1], [0, 0, 1, 1], [], []>} : vector<64x128xbf16>, vector<128x128xbf16>, vector<64x128xf32> -> vector<64x128xf32>
    %c19 = arith.constant 19 : index
    %c0_69 = arith.constant 0 : index
    %218 = vector.load %arg2[%c19, %c0_69] : memref<32x128xf32, #tpu.memory_space<vmem>>, vector<1x128xf32>
    %219 = vector.broadcast %218 : vector<1x128xf32> to vector<64x128xf32>
    %220 = arith.addf %217, %219 : vector<64x128xf32>
    %cst_70 = arith.constant 5.000000e-01 : f32
    %221 = vector.broadcast %cst_70 : f32 to vector<64x128xf32>
    %222 = arith.mulf %221, %220 : vector<64x128xf32>
    %cst_71 = arith.constant 4.471500e-02 : f32
    %223 = vector.broadcast %cst_71 : f32 to vector<64x128xf32>
    %224 = arith.mulf %223, %220 : vector<64x128xf32>
    %225 = arith.mulf %224, %220 : vector<64x128xf32>
    %226 = arith.mulf %225, %220 : vector<64x128xf32>
    %227 = arith.addf %220, %226 : vector<64x128xf32>
    %cst_72 = arith.constant 0.797884583 : f32
    %228 = vector.broadcast %cst_72 : f32 to vector<64x128xf32>
    %229 = arith.mulf %228, %227 : vector<64x128xf32>
    %230 = math.tanh %229 : vector<64x128xf32>
    %cst_73 = arith.constant 1.000000e+00 : f32
    %231 = vector.broadcast %cst_73 : f32 to vector<64x128xf32>
    %232 = arith.addf %231, %230 : vector<64x128xf32>
    %233 = arith.mulf %222, %232 : vector<64x128xf32>
    %234 = arith.truncf %233 : vector<64x128xf32> to vector<64x128xbf16>
    %c0_74 = arith.constant 0 : index
    %c0_75 = arith.constant 0 : index
    %235 = vector.load %arg6[%c0_74, %c0_75] : memref<128x128xbf16, #tpu.memory_space<vmem>>, vector<128x128xbf16>
    %cst_76 = arith.constant dense<0.000000e+00> : vector<64x128xf32>
    %236 = tpu.matmul %234, %235, %cst_76 {dimension_numbers = #tpu.dot_dimension_numbers<[1], [0], [0], [1], [0, 0, 1, 1], [], []>} : vector<64x128xbf16>, vector<128x128xbf16>, vector<64x128xf32> -> vector<64x128xf32>
    %237 = arith.addf %214, %236 : vector<64x128xf32>
    %c20 = arith.constant 20 : index
    %c0_77 = arith.constant 0 : index
    %238 = vector.load %arg2[%c20, %c0_77] : memref<32x128xf32, #tpu.memory_space<vmem>>, vector<1x128xf32>
    %239 = vector.broadcast %238 : vector<1x128xf32> to vector<64x128xf32>
    %240 = arith.addf %237, %239 : vector<64x128xf32>
    %c23 = arith.constant 23 : index
    %c0_78 = arith.constant 0 : index
    %241 = vector.load %arg2[%c23, %c0_78] : memref<32x128xf32, #tpu.memory_space<vmem>>, vector<1x128xf32>
    %c24 = arith.constant 24 : index
    %c0_79 = arith.constant 0 : index
    %242 = vector.load %arg2[%c24, %c0_79] : memref<32x128xf32, #tpu.memory_space<vmem>>, vector<1x128xf32>
    %cst_80 = arith.constant dense<0.000000e+00> : vector<64xf32>
    %243 = vector.multi_reduction <add>, %240, %cst_80 [1] : vector<64x128xf32> to vector<64xf32>
    %244 = vector.shape_cast %243 : vector<64xf32> to vector<64x1xf32>
    %cst_81 = arith.constant 1.280000e+02 : f32
    %245 = vector.broadcast %cst_81 : f32 to vector<64x1xf32>
    %246 = arith.divf %244, %245 : vector<64x1xf32>
    %247 = vector.broadcast %246 : vector<64x1xf32> to vector<64x128xf32>
    %248 = arith.subf %240, %247 : vector<64x128xf32>
    %249 = arith.mulf %248, %248 : vector<64x128xf32>
    %cst_82 = arith.constant dense<0.000000e+00> : vector<64xf32>
    %250 = vector.multi_reduction <add>, %249, %cst_82 [1] : vector<64x128xf32> to vector<64xf32>
    %251 = vector.shape_cast %250 : vector<64xf32> to vector<64x1xf32>
    %cst_83 = arith.constant 1.280000e+02 : f32
    %252 = vector.broadcast %cst_83 : f32 to vector<64x1xf32>
    %253 = arith.divf %251, %252 : vector<64x1xf32>
    %254 = vector.broadcast %246 : vector<64x1xf32> to vector<64x128xf32>
    %255 = arith.subf %240, %254 : vector<64x128xf32>
    %cst_84 = arith.constant 9.99999974E-6 : f32
    %256 = vector.broadcast %cst_84 : f32 to vector<64x1xf32>
    %257 = arith.addf %253, %256 : vector<64x1xf32>
    %258 = math.rsqrt %257 : vector<64x1xf32>
    %259 = vector.broadcast %258 : vector<64x1xf32> to vector<64x128xf32>
    %260 = arith.mulf %255, %259 : vector<64x128xf32>
    %261 = vector.broadcast %241 : vector<1x128xf32> to vector<64x128xf32>
    %262 = arith.mulf %260, %261 : vector<64x128xf32>
    %263 = vector.broadcast %242 : vector<1x128xf32> to vector<64x128xf32>
    %264 = arith.addf %262, %263 : vector<64x128xf32>
    %265 = vector.shape_cast %264 : vector<64x128xf32> to vector<4x16x128xf32>
    %c0_85 = arith.constant 0 : index
    %c0_86 = arith.constant 0 : index
    %c0_87 = arith.constant 0 : index
    %266 = vector.load %arg7[%c0_85, %c0_86, %c0_87] : memref<4x16x128xf32, #tpu.memory_space<vmem>>, vector<4x16x128xf32>
    tpu.vector_store %arg7[%c0_85, %c0_86, %c0_87], %265 {strides = array<i32>} : memref<4x16x128xf32, #tpu.memory_space<vmem>>, vector<4x16x128xf32>,
    return
  }
  func.func @transform_0(%arg0: i32) -> (i32, i32, i32) {
    %c0_i32 = arith.constant 0 : i32
    %c0_i32_0 = arith.constant 0 : i32
    %c0_i32_1 = arith.constant 0 : i32
    return %arg0, %c0_i32, %c0_i32_0 : i32, i32, i32
  }
  func.func @transform_1(%arg0: i32) -> (i32, i32) {
    %c0_i32 = arith.constant 0 : i32
    %c0_i32_0 = arith.constant 0 : i32
    %c0_i32_1 = arith.constant 0 : i32
    return %c0_i32, %c0_i32_0 : i32, i32
  }
  func.func @transform_2(%arg0: i32) -> (i32, i32) {
    %c0_i32 = arith.constant 0 : i32
    %c0_i32_0 = arith.constant 0 : i32
    %c0_i32_1 = arith.constant 0 : i32
    return %c0_i32, %c0_i32_0 : i32, i32
  }
  func.func @transform_3(%arg0: i32) -> (i32, i32) {
    %c0_i32 = arith.constant 0 : i32
    %c0_i32_0 = arith.constant 0 : i32
    %c0_i32_1 = arith.constant 0 : i32
    return %c0_i32, %c0_i32_0 : i32, i32
  }
  func.func @transform_4(%arg0: i32) -> (i32, i32) {
    %c0_i32 = arith.constant 0 : i32
    %c0_i32_0 = arith.constant 0 : i32
    %c0_i32_1 = arith.constant 0 : i32
    return %c0_i32, %c0_i32_0 : i32, i32
  }
  func.func @transform_5(%arg0: i32) -> (i32, i32) {
    %c0_i32 = arith.constant 0 : i32
    %c0_i32_0 = arith.constant 0 : i32
    %c0_i32_1 = arith.constant 0 : i32
    return %c0_i32, %c0_i32_0 : i32, i32
  }
  func.func @transform_6(%arg0: i32) -> (i32, i32, i32) {
    %c0_i32 = arith.constant 0 : i32
    %c0_i32_0 = arith.constant 0 : i32
    %c0_i32_1 = arith.constant 0 : i32
    return %arg0, %c0_i32, %c0_i32_0 : i32, i32, i32
  }
}

</mosaic_0001>

<llo_original>
// kernel: tpu_custom_call.1
$region0: #{tpu_custom_call.1}
  #allocation0 [shape = 'u32[]', space=smem, size = 0x4, offset = 0x4, fixed_abs, tag = 'smem constant byte address 0x4 - core index']
  #allocation1 [shape = 'u32[72,128]{1,0:T(1,128)}', space=vmem, size = 0x9000, scoped, tag = 'internal scratch']
  %s0 = inlined_call_operand.hbm [shape: f32[4,16,128], index: 0, kind: input, shape index: {}]
  %s1 = inlined_call_operand.hbm [shape: f32[32,128], index: 1, kind: input, shape index: {}]
  %s2 = inlined_call_operand.hbm [shape: bf16[128,512], index: 2, kind: input, shape index: {}]
  %s3 = inlined_call_operand.hbm [shape: bf16[128,128], index: 3, kind: input, shape index: {}]
  %s4 = inlined_call_operand.hbm [shape: bf16[128,128], index: 4, kind: input, shape index: {}]
  %s5 = inlined_call_operand.hbm [shape: bf16[128,128], index: 5, kind: input, shape index: {}]
  %s6 = inlined_call_operand.hbm [shape: f32[4,16,128], index: 6, kind: output, shape index: {}]
  %s7 = sld [smem:[#allocation0]]
  $region58: #{tpu_custom_call.1} parent=0
    _
  %s9 = ssub.s32 1, %s7
  %s10 = scalar_select 0, %s9, %s7
  $region1: #{tpu_custom_call.1} parent=0
    #allocation2 [shape = 'u8[32768]{0}', space=vmem, size = 0x8000, scoped, tag = 'input window, operand 0, single buffered']
    #allocation3 [shape = 's32[1]{0}', space=sflag, size = 0x4, scoped, tag = 'scoped memory for tpu_custom_call.1']
    #allocation4 [shape = 's32[1]{0}', space=sflag, size = 0x4, scoped, tag = 'scoped memory for tpu_custom_call.1']
    #allocation5 [shape = 'u8[16384]{0}', space=vmem, size = 0x4000, scoped, tag = 'input window, operand 1, single buffered']
    #allocation6 [shape = 's32[1]{0}', space=sflag, size = 0x4, scoped, tag = 'scoped memory for tpu_custom_call.1']
    #allocation7 [shape = 'u8[131072]{0}', space=vmem, size = 0x20000, scoped, tag = 'input window, operand 2, single buffered']
    #allocation8 [shape = 'u8[32768]{0}', space=vmem, size = 0x8000, scoped, tag = 'input window, operand 3, single buffered']
    #allocation9 [shape = 's32[1]{0}', space=sflag, size = 0x4, scoped, tag = 'scoped memory for tpu_custom_call.1']
    #allocation10 [shape = 'u8[32768]{0}', space=vmem, size = 0x8000, scoped, tag = 'input window, operand 4, single buffered']
    #allocation11 [shape = 'u8[32768]{0}', space=vmem, size = 0x8000, scoped, tag = 'input window, operand 5, single buffered']
    #allocation12 [shape = 's32[1]{0}', space=sflag, size = 0x4, scoped, tag = 'scoped memory for tpu_custom_call.1']
    #allocation13 [shape = 'u8[32768]{0}', space=vmem, size = 0x8000, scoped, tag = 'output window, operand 0, single buffered']
    %11 = vsyncpa [#allocation3], 0
    %12 = vsyncpa [#allocation6], 0
    %13 = vsyncpa [#allocation9], 0
    %14 = vsyncpa [#allocation12], 0
    %15 = vsyncpa [#allocation4], 0
    // Predicated region
    $region2: #{tpu_custom_call.1} parent=1 // pred_check
      _
    $region3: #{tpu_custom_call.1} parent=1 // pred_check_branch
      %17 = sbr.rel (0) target = $region5
    $region4: #{tpu_custom_call.1} parent=1 // pred_region
      %19 = vsyncadd [#allocation3], 0
      %s20 = sshll.u32 %s0, 4
      %s21 = int_to_ptr.hbm [resolvable:$true] %s20
      %s22 = sshll.u32 [#allocation2], 4
      %s23 = int_to_ptr.vmem [resolvable:$true] %s22
      %28 = dma.hbm_to_vmem [thread:$0]  %s21, 1024, %s23, [#allocation3], 128, 128, 8
    $region5: #{tpu_custom_call.1} parent=1 // pred_fallthru
      _
    // Predicated region
    $region6: #{tpu_custom_call.1} parent=1 // pred_check
      _
    $region7: #{tpu_custom_call.1} parent=1 // pred_check_branch
      %30 = sbr.rel (0) target = $region9
    $region8: #{tpu_custom_call.1} parent=1 // pred_region
      %32 = vsyncadd [#allocation6], 0
      %s33 = sshll.u32 %s1, 4
      %s34 = int_to_ptr.hbm [resolvable:$true] %s33
      %s35 = sshll.u32 [#allocation5], 4
      %s36 = int_to_ptr.vmem [resolvable:$true] %s35
      %41 = dma.hbm_to_vmem [thread:$0]  %s34, 512, %s36, [#allocation6], 128, 128, 8
    $region9: #{tpu_custom_call.1} parent=1 // pred_fallthru
      _
    // Predicated region
    $region10: #{tpu_custom_call.1} parent=1 // pred_check
      _
    $region11: #{tpu_custom_call.1} parent=1 // pred_check_branch
      %43 = sbr.rel (0) target = $region13
    $region12: #{tpu_custom_call.1} parent=1 // pred_region
      %45 = vsyncadd [#allocation6], 0
      %s46 = sshll.u32 %s2, 4
      %s47 = int_to_ptr.hbm [resolvable:$true] %s46
      %s48 = sshll.u32 [#allocation7], 4
      %s49 = int_to_ptr.vmem [resolvable:$true] %s48
      %54 = dma.hbm_to_vmem [thread:$0]  %s47, 4096, %s49, [#allocation6], 256, 256, 16
    $region13: #{tpu_custom_call.1} parent=1 // pred_fallthru
      _
    // Predicated region
    $region14: #{tpu_custom_call.1} parent=1 // pred_check
      _
    $region15: #{tpu_custom_call.1} parent=1 // pred_check_branch
      %56 = sbr.rel (0) target = $region17
    $region16: #{tpu_custom_call.1} parent=1 // pred_region
      %58 = vsyncadd [#allocation9], 0
      %s59 = sshll.u32 %s3, 4
      %s60 = int_to_ptr.hbm [resolvable:$true] %s59
      %s61 = sshll.u32 [#allocation8], 4
      %s62 = int_to_ptr.vmem [resolvable:$true] %s61
      %67 = dma.hbm_to_vmem [thread:$0]  %s60, 1024, %s62, [#allocation9], 64, 64, 4
    $region17: #{tpu_custom_call.1} parent=1 // pred_fallthru
      _
    // Predicated region
    $region18: #{tpu_custom_call.1} parent=1 // pred_check
      _
    $region19: #{tpu_custom_call.1} parent=1 // pred_check_branch
      %69 = sbr.rel (0) target = $region21
    $region20: #{tpu_custom_call.1} parent=1 // pred_region
      %71 = vsyncadd [#allocation9], 0
      %s72 = sshll.u32 %s4, 4
      %s73 = int_to_ptr.hbm [resolvable:$true] %s72
      %s74 = sshll.u32 [#allocation10], 4
      %s75 = int_to_ptr.vmem [resolvable:$true] %s74
      %80 = dma.hbm_to_vmem [thread:$0]  %s73, 1024, %s75, [#allocation9], 64, 64, 4
    $region21: #{tpu_custom_call.1} parent=1 // pred_fallthru
      _
    // Predicated region
    $region22: #{tpu_custom_call.1} parent=1 // pred_check
      _
    $region23: #{tpu_custom_call.1} parent=1 // pred_check_branch
      %82 = sbr.rel (0) target = $region25
    $region24: #{tpu_custom_call.1} parent=1 // pred_region
      %84 = vsyncadd [#allocation12], 0
      %s85 = sshll.u32 %s5, 4
      %s86 = int_to_ptr.hbm [resolvable:$true] %s85
      %s87 = sshll.u32 [#allocation11], 4
      %s88 = int_to_ptr.vmem [resolvable:$true] %s87
      %93 = dma.hbm_to_vmem [thread:$0]  %s86, 1024, %s88, [#allocation12], 64, 64, 4
    $region25: #{tpu_custom_call.1} parent=1 // pred_fallthru
      _
    // Predicated region
    $region26: #{tpu_custom_call.1} parent=1 // pred_check
      _
    $region27: #{tpu_custom_call.1} parent=1 // pred_check_branch
      %95 = sbr.rel (0) target = $region29
    $region28: #{tpu_custom_call.1} parent=1 // pred_region
      %97 = dma.done [#allocation3], 1024
    $region29: #{tpu_custom_call.1} parent=1 // pred_fallthru
      _
    // Predicated region
    $region30: #{tpu_custom_call.1} parent=1 // pred_check
      _
    $region31: #{tpu_custom_call.1} parent=1 // pred_check_branch
      %99 = sbr.rel (0) target = $region33
    $region32: #{tpu_custom_call.1} parent=1 // pred_region
      %101 = dma.done [#allocation6], 512
    $region33: #{tpu_custom_call.1} parent=1 // pred_fallthru
      _
    // Predicated region
    $region34: #{tpu_custom_call.1} parent=1 // pred_check
      _
    $region35: #{tpu_custom_call.1} parent=1 // pred_check_branch
      %103 = sbr.rel (0) target = $region37
    $region36: #{tpu_custom_call.1} parent=1 // pred_region
      %105 = dma.done [#allocation6], 4096
    $region37: #{tpu_custom_call.1} parent=1 // pred_fallthru
      _
    // Predicated region
    $region38: #{tpu_custom_call.1} parent=1 // pred_check
      _
    $region39: #{tpu_custom_call.1} parent=1 // pred_check_branch
      %107 = sbr.rel (0) target = $region41
    $region40: #{tpu_custom_call.1} parent=1 // pred_region
      %109 = dma.done [#allocation9], 1024
    $region41: #{tpu_custom_call.1} parent=1 // pred_fallthru
      _
    // Predicated region
    $region42: #{tpu_custom_call.1} parent=1 // pred_check
      _
    $region43: #{tpu_custom_call.1} parent=1 // pred_check_branch
      %111 = sbr.rel (0) target = $region45
    $region44: #{tpu_custom_call.1} parent=1 // pred_region
      %113 = dma.done [#allocation9], 1024
    $region45: #{tpu_custom_call.1} parent=1 // pred_fallthru
      _
    // Predicated region
    $region46: #{tpu_custom_call.1} parent=1 // pred_check
      _
    $region47: #{tpu_custom_call.1} parent=1 // pred_check_branch
      %115 = sbr.rel (0) target = $region49
    $region48: #{tpu_custom_call.1} parent=1 // pred_region
      %117 = dma.done [#allocation12], 1024
    $region49: #{tpu_custom_call.1} parent=1 // pred_fallthru
      _
    %v119 = vld [vmem:[#allocation2] sm:$0xff]
    %v120 = vld [vmem:[#allocation2 + $0x8] sm:$0xff]
    %v121 = vld [vmem:[#allocation2 + $0x10] sm:$0xff]
    %v122 = vld [vmem:[#allocation2 + $0x18] sm:$0xff]
    %v123 = vld [vmem:[#allocation2 + $0x20] sm:$0xff]
    %v124 = vld [vmem:[#allocation2 + $0x28] sm:$0xff]
    %v125 = vld [vmem:[#allocation2 + $0x30] sm:$0xff]
    %v126 = vld [vmem:[#allocation2 + $0x38] sm:$0xff]
    %v127 = vlaneseq
    %v128 = vshrl.u32 %v127, 7
    %v129 = vadd.s32 %v128, 8
    %v130 = vadd.s32 %v128, 16
    %v131 = vadd.s32 %v128, 24
    %v132 = vadd.s32 %v128, 32
    %v133 = vadd.s32 %v128, 40
    %v134 = vadd.s32 %v128, 48
    %v135 = vadd.s32 %v128, 56
    %vm136 = vcmp.lt.s32.totalorder %v128, 0
    %v137 = vsub.s32 0, %v128
    %v138 = vsel %vm136, %v137, %v128
    %v139 = vshrl.u32 %v138, 4
    %v140 = vand.u32 %v138, 15
    %v141 = vsub.s32 0, %v140
    %v142 = vsel %vm136, %v141, %v140
    %vm143 = vcmp.lt.s32.totalorder %v129, 0
    %v144 = vsub.s32 0, %v129
    %v145 = vsel %vm143, %v144, %v129
    %v146 = vshrl.u32 %v145, 4
    %v147 = vand.u32 %v145, 15
    %v148 = vsub.s32 0, %v147
    %v149 = vsel %vm143, %v148, %v147
    %vm150 = vcmp.lt.s32.totalorder %v130, 0
    %v151 = vsub.s32 0, %v130
    %v152 = vsel %vm150, %v151, %v130
    %v153 = vshrl.u32 %v152, 4
    %v154 = vand.u32 %v152, 15
    %v155 = vsub.s32 0, %v154
    %v156 = vsel %vm150, %v155, %v154
    %vm157 = vcmp.lt.s32.totalorder %v131, 0
    %v158 = vsub.s32 0, %v131
    %v159 = vsel %vm157, %v158, %v131
    %v160 = vshrl.u32 %v159, 4
    %v161 = vand.u32 %v159, 15
    %v162 = vsub.s32 0, %v161
    %v163 = vsel %vm157, %v162, %v161
    %vm164 = vcmp.lt.s32.totalorder %v132, 0
    %v165 = vsub.s32 0, %v132
    %v166 = vsel %vm164, %v165, %v132
    %v167 = vshrl.u32 %v166, 4
    %v168 = vand.u32 %v166, 15
    %v169 = vsub.s32 0, %v168
    %v170 = vsel %vm164, %v169, %v168
    %vm171 = vcmp.lt.s32.totalorder %v133, 0
    %v172 = vsub.s32 0, %v133
    %v173 = vsel %vm171, %v172, %v133
    %v174 = vshrl.u32 %v173, 4
    %v175 = vand.u32 %v173, 15
    %v176 = vsub.s32 0, %v175
    %v177 = vsel %vm171, %v176, %v175
    %vm178 = vcmp.lt.s32.totalorder %v134, 0
    %v179 = vsub.s32 0, %v134
    %v180 = vsel %vm178, %v179, %v134
    %v181 = vshrl.u32 %v180, 4
    %v182 = vand.u32 %v180, 15
    %v183 = vsub.s32 0, %v182
    %v184 = vsel %vm178, %v183, %v182
    %vm185 = vcmp.lt.s32.totalorder %v135, 0
    %v186 = vsub.s32 0, %v135
    %v187 = vsel %vm185, %v186, %v135
    %v188 = vshrl.u32 %v187, 4
    %v189 = vand.u32 %v187, 15
    %v190 = vsub.s32 0, %v189
    %v191 = vsel %vm185, %v190, %v189
    %vm192 = vcmp.ne.s32.totalorder %v142, 0
    %vm193 = vcmp.ne.s32.totalorder %v149, 0
    %vm194 = vcmp.ne.s32.totalorder %v156, 0
    %vm195 = vcmp.ne.s32.totalorder %v163, 0
    %vm196 = vcmp.ne.s32.totalorder %v170, 0
    %vm197 = vcmp.ne.s32.totalorder %v177, 0
    %vm198 = vcmp.ne.s32.totalorder %v184, 0
    %vm199 = vcmp.ne.s32.totalorder %v191, 0
    %vm200 = vcmp.ne.s32.totalorder %v142, 15
    %vm201 = vcmp.ne.s32.totalorder %v149, 15
    %vm202 = vcmp.ne.s32.totalorder %v156, 15
    %vm203 = vcmp.ne.s32.totalorder %v163, 15
    %vm204 = vcmp.ne.s32.totalorder %v170, 15
    %vm205 = vcmp.ne.s32.totalorder %v177, 15
    %vm206 = vcmp.ne.s32.totalorder %v184, 15
    %vm207 = vcmp.ne.s32.totalorder %v191, 15
    %v208 = vrot.slane %v119, 7
    %v209 = vrot.slane %v120, 7
    %v210 = vrot.slane %v121, 7
    %v211 = vrot.slane %v122, 7
    %v212 = vrot.slane %v123, 7
    %v213 = vrot.slane %v124, 7
    %v214 = vrot.slane %v125, 7
    %v215 = vrot.slane %v126, 7
    %vm216 = vcmp.lt.s32.totalorder %v128, 1
    %v217 = vsel %vm216, %v214, %v215
    %v218 = vsel %vm216, %v213, %v214
    %v219 = vsel %vm216, %v212, %v213
    %v220 = vsel %vm216, %v211, %v212
    %v221 = vsel %vm216, %v210, %v211
    %v222 = vsel %vm216, %v209, %v210
    %v223 = vsel %vm216, %v208, %v209
    %v224 = vsel %vm216, %v215, %v208
    %v225 = vsel %vm192, 1, 0
    %v226 = vsel %vm193, 1, 0
    %v227 = vsel %vm194, 1, 0
    %v228 = vsel %vm195, 1, 0
    %v229 = vsel %vm196, 1, 0
    %v230 = vsel %vm197, 1, 0
    %v231 = vsel %vm198, 1, 0
    %v232 = vsel %vm199, 1, 0
    %vm233 = vcmp.eq.s32.totalorder %v225, 1
    %vm234 = vcmp.eq.s32.totalorder %v226, 1
    %vm235 = vcmp.eq.s32.totalorder %v227, 1
    %vm236 = vcmp.eq.s32.totalorder %v228, 1
    %vm237 = vcmp.eq.s32.totalorder %v229, 1
    %vm238 = vcmp.eq.s32.totalorder %v230, 1
    %vm239 = vcmp.eq.s32.totalorder %v231, 1
    %vm240 = vcmp.eq.s32.totalorder %v232, 1
    %v241 = vsel %vm233, %v224, 0.0
    %v242 = vsel %vm234, %v223, 0.0
    %v243 = vsel %vm235, %v222, 0.0
    %v244 = vsel %vm236, %v221, 0.0
    %v245 = vsel %vm237, %v220, 0.0
    %v246 = vsel %vm238, %v219, 0.0
    %v247 = vsel %vm239, %v218, 0.0
    %v248 = vsel %vm240, %v217, 0.0
    %v249 = vrot.slane %v119, 1
    %v250 = vrot.slane %v120, 1
    %v251 = vrot.slane %v121, 1
    %v252 = vrot.slane %v122, 1
    %v253 = vrot.slane %v123, 1
    %v254 = vrot.slane %v124, 1
    %v255 = vrot.slane %v125, 1
    %v256 = vrot.slane %v126, 1
    %vm257 = vcmp.lt.s32.totalorder %v128, 7
    %v258 = vsel %vm257, %v255, %v256
    %v259 = vsel %vm257, %v254, %v255
    %v260 = vsel %vm257, %v253, %v254
    %v261 = vsel %vm257, %v252, %v253
    %v262 = vsel %vm257, %v251, %v252
    %v263 = vsel %vm257, %v250, %v251
    %v264 = vsel %vm257, %v249, %v250
    %v265 = vsel %vm257, %v256, %v249
    %v266 = vsel %vm200, 1, 0
    %v267 = vsel %vm201, 1, 0
    %v268 = vsel %vm202, 1, 0
    %v269 = vsel %vm203, 1, 0
    %v270 = vsel %vm204, 1, 0
    %v271 = vsel %vm205, 1, 0
    %v272 = vsel %vm206, 1, 0
    %v273 = vsel %vm207, 1, 0
    %vm274 = vcmp.eq.s32.totalorder %v266, 1
    %vm275 = vcmp.eq.s32.totalorder %v267, 1
    %vm276 = vcmp.eq.s32.totalorder %v268, 1
    %vm277 = vcmp.eq.s32.totalorder %v269, 1
    %vm278 = vcmp.eq.s32.totalorder %v270, 1
    %vm279 = vcmp.eq.s32.totalorder %v271, 1
    %vm280 = vcmp.eq.s32.totalorder %v272, 1
    %vm281 = vcmp.eq.s32.totalorder %v273, 1
    %v282 = vsel %vm274, %v264, 0.0
    %v283 = vsel %vm275, %v263, 0.0
    %v284 = vsel %vm276, %v262, 0.0
    %v285 = vsel %vm277, %v261, 0.0
    %v286 = vsel %vm278, %v260, 0.0
    %v287 = vsel %vm279, %v259, 0.0
    %v288 = vsel %vm280, %v258, 0.0
    %v289 = vsel %vm281, %v265, 0.0
    %v290 = vld [vmem:[#allocation5] sm:$0x1]
    %v291 = vperm.slane %v290, 0
    %v292 = vmul.f32 %v291, %v241
    %v293 = vmul.f32 %v291, %v242
    %v294 = vmul.f32 %v291, %v243
    %v295 = vmul.f32 %v291, %v244
    %v296 = vmul.f32 %v291, %v245
    %v297 = vmul.f32 %v291, %v246
    %v298 = vmul.f32 %v291, %v247
    %v299 = vmul.f32 %v291, %v248
    %v300 = vld [vmem:[#allocation5 + $0x1] sm:$0x1]
    %v301 = vperm.slane %v300, 0
    %v302 = vmul.f32 %v301, %v119
    %v303 = vmul.f32 %v301, %v120
    %v304 = vmul.f32 %v301, %v121
    %v305 = vmul.f32 %v301, %v122
    %v306 = vmul.f32 %v301, %v123
    %v307 = vmul.f32 %v301, %v124
    %v308 = vmul.f32 %v301, %v125
    %v309 = vmul.f32 %v301, %v126
    %v310 = vadd.f32 %v292, %v302
    %v311 = vadd.f32 %v293, %v303
    %v312 = vadd.f32 %v294, %v304
    %v313 = vadd.f32 %v295, %v305
    %v314 = vadd.f32 %v296, %v306
    %v315 = vadd.f32 %v297, %v307
    %v316 = vadd.f32 %v298, %v308
    %v317 = vadd.f32 %v299, %v309
    %v318 = vld [vmem:[#allocation5 + $0x2] sm:$0x1]
    %v319 = vperm.slane %v318, 0
    %v320 = vmul.f32 %v319, %v282
    %v321 = vmul.f32 %v319, %v283
    %v322 = vmul.f32 %v319, %v284
    %v323 = vmul.f32 %v319, %v285
    %v324 = vmul.f32 %v319, %v286
    %v325 = vmul.f32 %v319, %v287
    %v326 = vmul.f32 %v319, %v288
    %v327 = vmul.f32 %v319, %v289
    %v328 = vadd.f32 %v310, %v320
    %v329 = vadd.f32 %v311, %v321
    %v330 = vadd.f32 %v312, %v322
    %v331 = vadd.f32 %v313, %v323
    %v332 = vadd.f32 %v314, %v324
    %v333 = vadd.f32 %v315, %v325
    %v334 = vadd.f32 %v316, %v326
    %v335 = vadd.f32 %v317, %v327
    %v336 = vld [vmem:[#allocation5 + $0x3] sm:$0x1]
    %v337 = vperm.slane %v336, 0
    %v338 = vadd.f32 %v328, %v337
    %v339 = vadd.f32 %v329, %v337
    %v340 = vadd.f32 %v330, %v337
    %v341 = vadd.f32 %v331, %v337
    %v342 = vadd.f32 %v332, %v337
    %v343 = vadd.f32 %v333, %v337
    %v344 = vadd.f32 %v334, %v337
    %v345 = vadd.f32 %v335, %v337
    %v346 = vadd.f32 %v119, %v338
    %v347 = vadd.f32 %v120, %v339
    %v348 = vadd.f32 %v121, %v340
    %v349 = vadd.f32 %v122, %v341
    %v350 = vadd.f32 %v123, %v342
    %v351 = vadd.f32 %v124, %v343
    %v352 = vadd.f32 %v125, %v344
    %v353 = vadd.f32 %v126, %v345
    %v354 = vld [vmem:[#allocation5 + $0x6] sm:$0x1]
    %v355 = vld [vmem:[#allocation5 + $0x7] sm:$0x1]
    %356 = vadd.xlane.f32.xlu0 %v119
    %v357 = vpop.xlane.xlu0 %356
    %358 = vadd.xlane.f32.xlu0 %v120
    %v359 = vpop.xlane.xlu0 %358
    %360 = vadd.xlane.f32.xlu0 %v121
    %v361 = vpop.xlane.xlu0 %360
    %362 = vadd.xlane.f32.xlu0 %v122
    %v363 = vpop.xlane.xlu0 %362
    %364 = vadd.xlane.f32.xlu0 %v123
    %v365 = vpop.xlane.xlu0 %364
    %366 = vadd.xlane.f32.xlu0 %v124
    %v367 = vpop.xlane.xlu0 %366
    %368 = vadd.xlane.f32.xlu0 %v125
    %v369 = vpop.xlane.xlu0 %368
    %370 = vadd.xlane.f32.xlu0 %v126
    %v371 = vpop.xlane.xlu0 %370
    %v372 = vrcp.pop 128.0
    %v373 = vmul.f32 128.0, %v372
    %v374 = vsub.f32 1.0, %v373
    %v375 = vmul.f32 %v372, %v374
    %v376 = vadd.f32 %v372, %v375
    %vm377 = vweird.f32 %v372
    %v378 = vsel %vm377, %v372, %v376
    %v379 = vmul.f32 %v357, %v378
    %v380 = vmul.f32 %v359, %v378
    %v381 = vmul.f32 %v361, %v378
    %v382 = vmul.f32 %v363, %v378
    %v383 = vmul.f32 %v365, %v378
    %v384 = vmul.f32 %v367, %v378
    %v385 = vmul.f32 %v369, %v378
    %v386 = vmul.f32 %v371, %v378
    %v387 = vsub.f32 %v119, %v379
    %v388 = vsub.f32 %v120, %v380
    %v389 = vsub.f32 %v121, %v381
    %v390 = vsub.f32 %v122, %v382
    %v391 = vsub.f32 %v123, %v383
    %v392 = vsub.f32 %v124, %v384
    %v393 = vsub.f32 %v125, %v385
    %v394 = vsub.f32 %v126, %v386
    %v395 = vmul.f32 %v387, %v387
    %v396 = vmul.f32 %v388, %v388
    %v397 = vmul.f32 %v389, %v389
    %v398 = vmul.f32 %v390, %v390
    %v399 = vmul.f32 %v391, %v391
    %v400 = vmul.f32 %v392, %v392
    %v401 = vmul.f32 %v393, %v393
    %v402 = vmul.f32 %v394, %v394
    %403 = vadd.xlane.f32.xlu0 %v395
    %v404 = vpop.xlane.xlu0 %403
    %405 = vadd.xlane.f32.xlu0 %v396
    %v406 = vpop.xlane.xlu0 %405
    %407 = vadd.xlane.f32.xlu0 %v397
    %v408 = vpop.xlane.xlu0 %407
    %409 = vadd.xlane.f32.xlu0 %v398
    %v410 = vpop.xlane.xlu0 %409
    %411 = vadd.xlane.f32.xlu0 %v399
    %v412 = vpop.xlane.xlu0 %411
    %413 = vadd.xlane.f32.xlu0 %v400
    %v414 = vpop.xlane.xlu0 %413
    %415 = vadd.xlane.f32.xlu0 %v401
    %v416 = vpop.xlane.xlu0 %415
    %417 = vadd.xlane.f32.xlu0 %v402
    %v418 = vpop.xlane.xlu0 %417
    %v419 = vmul.f32 %v404, %v378
    %v420 = vmul.f32 %v406, %v378
    %v421 = vmul.f32 %v408, %v378
    %v422 = vmul.f32 %v410, %v378
    %v423 = vmul.f32 %v412, %v378
    %v424 = vmul.f32 %v414, %v378
    %v425 = vmul.f32 %v416, %v378
    %v426 = vmul.f32 %v418, %v378
    %v427 = vadd.f32 %v419, 1e-05
    %v428 = vadd.f32 %v420, 1e-05
    %v429 = vadd.f32 %v421, 1e-05
    %v430 = vadd.f32 %v422, 1e-05
    %v431 = vadd.f32 %v423, 1e-05
    %v432 = vadd.f32 %v424, 1e-05
    %v433 = vadd.f32 %v425, 1e-05
    %v434 = vadd.f32 %v426, 1e-05
    %v435 = vrsqrt.pop %v427
    %v436 = vmul.f32 %v435, %v427
    %v437 = vmul.f32 %v436, %v435
    %v438 = vmul.f32 0.5, %v437
    %v439 = vsub.f32 1.5, %v438
    %v440 = vmul.f32 %v435, %v439
    %vm441 = vweird.f32 %v427
    %vm442 = vweird.f32 %v435
    %vm443 = vmor %vm441, %vm442
    %v444 = vsel %vm443, %v435, %v440
    %v445 = vrsqrt.pop %v428
    %v446 = vmul.f32 %v445, %v428
    %v447 = vmul.f32 %v446, %v445
    %v448 = vmul.f32 0.5, %v447
    %v449 = vsub.f32 1.5, %v448
    %v450 = vmul.f32 %v445, %v449
    %vm451 = vweird.f32 %v428
    %vm452 = vweird.f32 %v445
    %vm453 = vmor %vm451, %vm452
    %v454 = vsel %vm453, %v445, %v450
    %v455 = vrsqrt.pop %v429
    %v456 = vmul.f32 %v455, %v429
    %v457 = vmul.f32 %v456, %v455
    %v458 = vmul.f32 0.5, %v457
    %v459 = vsub.f32 1.5, %v458
    %v460 = vmul.f32 %v455, %v459
    %vm461 = vweird.f32 %v429
    %vm462 = vweird.f32 %v455
    %vm463 = vmor %vm461, %vm462
    %v464 = vsel %vm463, %v455, %v460
    %v465 = vrsqrt.pop %v430
    %v466 = vmul.f32 %v465, %v430
    %v467 = vmul.f32 %v466, %v465
    %v468 = vmul.f32 0.5, %v467
    %v469 = vsub.f32 1.5, %v468
    %v470 = vmul.f32 %v465, %v469
    %vm471 = vweird.f32 %v430
    %vm472 = vweird.f32 %v465
    %vm473 = vmor %vm471, %vm472
    %v474 = vsel %vm473, %v465, %v470
    %v475 = vrsqrt.pop %v431
    %v476 = vmul.f32 %v475, %v431
    %v477 = vmul.f32 %v476, %v475
    %v478 = vmul.f32 0.5, %v477
    %v479 = vsub.f32 1.5, %v478
    %v480 = vmul.f32 %v475, %v479
    %vm481 = vweird.f32 %v431
    %vm482 = vweird.f32 %v475
    %vm483 = vmor %vm481, %vm482
    %v484 = vsel %vm483, %v475, %v480
    %v485 = vrsqrt.pop %v432
    %v486 = vmul.f32 %v485, %v432
    %v487 = vmul.f32 %v486, %v485
    %v488 = vmul.f32 0.5, %v487
    %v489 = vsub.f32 1.5, %v488
    %v490 = vmul.f32 %v485, %v489
    %vm491 = vweird.f32 %v432
    %vm492 = vweird.f32 %v485
    %vm493 = vmor %vm491, %vm492
    %v494 = vsel %vm493, %v485, %v490
    %v495 = vrsqrt.pop %v433
    %v496 = vmul.f32 %v495, %v433
    %v497 = vmul.f32 %v496, %v495
    %v498 = vmul.f32 0.5, %v497
    %v499 = vsub.f32 1.5, %v498
    %v500 = vmul.f32 %v495, %v499
    %vm501 = vweird.f32 %v433
    %vm502 = vweird.f32 %v495
    %vm503 = vmor %vm501, %vm502
    %v504 = vsel %vm503, %v495, %v500
    %v505 = vrsqrt.pop %v434
    %v506 = vmul.f32 %v505, %v434
    %v507 = vmul.f32 %v506, %v505
    %v508 = vmul.f32 0.5, %v507
    %v509 = vsub.f32 1.5, %v508
    %v510 = vmul.f32 %v505, %v509
    %vm511 = vweird.f32 %v434
    %vm512 = vweird.f32 %v505
    %vm513 = vmor %vm511, %vm512
    %v514 = vsel %vm513, %v505, %v510
    %v515 = vmul.f32 %v387, %v444
    %v516 = vmul.f32 %v388, %v454
    %v517 = vmul.f32 %v389, %v464
    %v518 = vmul.f32 %v390, %v474
    %v519 = vmul.f32 %v391, %v484
    %v520 = vmul.f32 %v392, %v494
    %v521 = vmul.f32 %v393, %v504
    %v522 = vmul.f32 %v394, %v514
    %v523 = vperm.slane %v354, 0
    %v524 = vmul.f32 %v515, %v523
    %v525 = vmul.f32 %v516, %v523
    %v526 = vmul.f32 %v517, %v523
    %v527 = vmul.f32 %v518, %v523
    %v528 = vmul.f32 %v519, %v523
    %v529 = vmul.f32 %v520, %v523
    %v530 = vmul.f32 %v521, %v523
    %v531 = vmul.f32 %v522, %v523
    %v532 = vperm.slane %v355, 0
    %v533 = vadd.f32 %v524, %v532
    %v534 = vadd.f32 %v525, %v532
    %v535 = vadd.f32 %v526, %v532
    %v536 = vadd.f32 %v527, %v532
    %v537 = vadd.f32 %v528, %v532
    %v538 = vadd.f32 %v529, %v532
    %v539 = vadd.f32 %v530, %v532
    %v540 = vadd.f32 %v531, %v532
    %v541 = vrot.slane %v533, 7
    %v542 = vrot.slane %v534, 7
    %v543 = vrot.slane %v535, 7
    %v544 = vrot.slane %v536, 7
    %v545 = vrot.slane %v537, 7
    %v546 = vrot.slane %v538, 7
    %v547 = vrot.slane %v539, 7
    %v548 = vrot.slane %v540, 7
    %v549 = vsel %vm216, %v547, %v548
    %v550 = vsel %vm216, %v546, %v547
    %v551 = vsel %vm216, %v545, %v546
    %v552 = vsel %vm216, %v544, %v545
    %v553 = vsel %vm216, %v543, %v544
    %v554 = vsel %vm216, %v542, %v543
    %v555 = vsel %vm216, %v541, %v542
    %v556 = vsel %vm216, %v548, %v541
    %v557 = vsel %vm233, %v556, 0.0
    %v558 = vsel %vm234, %v555, 0.0
    %v559 = vsel %vm235, %v554, 0.0
    %v560 = vsel %vm236, %v553, 0.0
    %v561 = vsel %vm237, %v552, 0.0
    %v562 = vsel %vm238, %v551, 0.0
    %v563 = vsel %vm239, %v550, 0.0
    %v564 = vsel %vm240, %v549, 0.0
    %v565 = vrot.slane %v533, 1
    %v566 = vrot.slane %v534, 1
    %v567 = vrot.slane %v535, 1
    %v568 = vrot.slane %v536, 1
    %v569 = vrot.slane %v537, 1
    %v570 = vrot.slane %v538, 1
    %v571 = vrot.slane %v539, 1
    %v572 = vrot.slane %v540, 1
    %v573 = vsel %vm257, %v571, %v572
    %v574 = vsel %vm257, %v570, %v571
    %v575 = vsel %vm257, %v569, %v570
    %v576 = vsel %vm257, %v568, %v569
    %v577 = vsel %vm257, %v567, %v568
    %v578 = vsel %vm257, %v566, %v567
    %v579 = vsel %vm257, %v565, %v566
    %v580 = vsel %vm257, %v572, %v565
    %v581 = vsel %vm274, %v579, 0.0
    %v582 = vsel %vm275, %v578, 0.0
    %v583 = vsel %vm276, %v577, 0.0
    %v584 = vsel %vm277, %v576, 0.0
    %v585 = vsel %vm278, %v575, 0.0
    %v586 = vsel %vm279, %v574, 0.0
    %v587 = vsel %vm280, %v573, 0.0
    %v588 = vsel %vm281, %v580, 0.0
    %v589 = vld [vmem:[#allocation5 + $0x8] sm:$0x1]
    %v590 = vperm.slane %v589, 0
    %v591 = vmul.f32 %v590, %v557
    %v592 = vmul.f32 %v590, %v558
    %v593 = vmul.f32 %v590, %v559
    %v594 = vmul.f32 %v590, %v560
    %v595 = vmul.f32 %v590, %v561
    %v596 = vmul.f32 %v590, %v562
    %v597 = vmul.f32 %v590, %v563
    %v598 = vmul.f32 %v590, %v564
    %v599 = vld [vmem:[#allocation5 + $0x9] sm:$0x1]
    %v600 = vperm.slane %v599, 0
    %v601 = vmul.f32 %v600, %v533
    %v602 = vmul.f32 %v600, %v534
    %v603 = vmul.f32 %v600, %v535
    %v604 = vmul.f32 %v600, %v536
    %v605 = vmul.f32 %v600, %v537
    %v606 = vmul.f32 %v600, %v538
    %v607 = vmul.f32 %v600, %v539
    %v608 = vmul.f32 %v600, %v540
    %v609 = vadd.f32 %v591, %v601
    %v610 = vadd.f32 %v592, %v602
    %v611 = vadd.f32 %v593, %v603
    %v612 = vadd.f32 %v594, %v604
    %v613 = vadd.f32 %v595, %v605
    %v614 = vadd.f32 %v596, %v606
    %v615 = vadd.f32 %v597, %v607
    %v616 = vadd.f32 %v598, %v608
    %v617 = vld [vmem:[#allocation5 + $0xa] sm:$0x1]
    %v618 = vperm.slane %v617, 0
    %v619 = vmul.f32 %v618, %v581
    %v620 = vmul.f32 %v618, %v582
    %v621 = vmul.f32 %v618, %v583
    %v622 = vmul.f32 %v618, %v584
    %v623 = vmul.f32 %v618, %v585
    %v624 = vmul.f32 %v618, %v586
    %v625 = vmul.f32 %v618, %v587
    %v626 = vmul.f32 %v618, %v588
    %v627 = vadd.f32 %v609, %v619
    %v628 = vadd.f32 %v610, %v620
    %v629 = vadd.f32 %v611, %v621
    %v630 = vadd.f32 %v612, %v622
    %v631 = vadd.f32 %v613, %v623
    %v632 = vadd.f32 %v614, %v624
    %v633 = vadd.f32 %v615, %v625
    %v634 = vadd.f32 %v616, %v626
    %v635 = vld [vmem:[#allocation5 + $0xb] sm:$0x1]
    %v636 = vperm.slane %v635, 0
    %v637 = vadd.f32 %v627, %v636
    %v638 = vadd.f32 %v628, %v636
    %v639 = vadd.f32 %v629, %v636
    %v640 = vadd.f32 %v630, %v636
    %v641 = vadd.f32 %v631, %v636
    %v642 = vadd.f32 %v632, %v636
    %v643 = vadd.f32 %v633, %v636
    %v644 = vadd.f32 %v634, %v636
    %v645 = vmul.f32 %v637, 0.5
    %v646 = vmul.f32 %v638, 0.5
    %v647 = vmul.f32 %v639, 0.5
    %v648 = vmul.f32 %v640, 0.5
    %v649 = vmul.f32 %v641, 0.5
    %v650 = vmul.f32 %v642, 0.5
    %v651 = vmul.f32 %v643, 0.5
    %v652 = vmul.f32 %v644, 0.5
    %v653 = vmul.f32 %v637, 0.044715
    %v654 = vmul.f32 %v638, 0.044715
    %v655 = vmul.f32 %v639, 0.044715
    %v656 = vmul.f32 %v640, 0.044715
    %v657 = vmul.f32 %v641, 0.044715
    %v658 = vmul.f32 %v642, 0.044715
    %v659 = vmul.f32 %v643, 0.044715
    %v660 = vmul.f32 %v644, 0.044715
    %v661 = vmul.f32 %v653, %v637
    %v662 = vmul.f32 %v654, %v638
    %v663 = vmul.f32 %v655, %v639
    %v664 = vmul.f32 %v656, %v640
    %v665 = vmul.f32 %v657, %v641
    %v666 = vmul.f32 %v658, %v642
    %v667 = vmul.f32 %v659, %v643
    %v668 = vmul.f32 %v660, %v644
    %v669 = vmul.f32 %v661, %v637
    %v670 = vmul.f32 %v662, %v638
    %v671 = vmul.f32 %v663, %v639
    %v672 = vmul.f32 %v664, %v640
    %v673 = vmul.f32 %v665, %v641
    %v674 = vmul.f32 %v666, %v642
    %v675 = vmul.f32 %v667, %v643
    %v676 = vmul.f32 %v668, %v644
    %v677 = vadd.f32 %v637, %v669
    %v678 = vadd.f32 %v638, %v670
    %v679 = vadd.f32 %v639, %v671
    %v680 = vadd.f32 %v640, %v672
    %v681 = vadd.f32 %v641, %v673
    %v682 = vadd.f32 %v642, %v674
    %v683 = vadd.f32 %v643, %v675
    %v684 = vadd.f32 %v644, %v676
    %v685 = vmul.f32 %v677, 0.7978846
    %v686 = vmul.f32 %v678, 0.7978846
    %v687 = vmul.f32 %v679, 0.7978846
    %v688 = vmul.f32 %v680, 0.7978846
    %v689 = vmul.f32 %v681, 0.7978846
    %v690 = vmul.f32 %v682, 0.7978846
    %v691 = vmul.f32 %v683, 0.7978846
    %v692 = vmul.f32 %v684, 0.7978846
    %v693 = vtanh.pop %v685
    %v694 = vtanh.pop %v686
    %v695 = vtanh.pop %v687
    %v696 = vtanh.pop %v688
    %v697 = vtanh.pop %v689
    %v698 = vtanh.pop %v690
    %v699 = vtanh.pop %v691
    %v700 = vtanh.pop %v692
    %v701 = vadd.f32 %v693, 1.0
    %v702 = vadd.f32 %v694, 1.0
    %v703 = vadd.f32 %v695, 1.0
    %v704 = vadd.f32 %v696, 1.0
    %v705 = vadd.f32 %v697, 1.0
    %v706 = vadd.f32 %v698, 1.0
    %v707 = vadd.f32 %v699, 1.0
    %v708 = vadd.f32 %v700, 1.0
    %v709 = vmul.f32 %v645, %v701
    %v710 = vmul.f32 %v646, %v702
    %v711 = vmul.f32 %v647, %v703
    %v712 = vmul.f32 %v648, %v704
    %v713 = vmul.f32 %v649, %v705
    %v714 = vmul.f32 %v650, %v706
    %v715 = vmul.f32 %v651, %v707
    %v716 = vmul.f32 %v652, %v708
    %v717 = vrot.slane %v709, 7
    %v718 = vrot.slane %v710, 7
    %v719 = vrot.slane %v711, 7
    %v720 = vrot.slane %v712, 7
    %v721 = vrot.slane %v713, 7
    %v722 = vrot.slane %v714, 7
    %v723 = vrot.slane %v715, 7
    %v724 = vrot.slane %v716, 7
    %v725 = vsel %vm216, %v723, %v724
    %v726 = vsel %vm216, %v722, %v723
    %v727 = vsel %vm216, %v721, %v722
    %v728 = vsel %vm216, %v720, %v721
    %v729 = vsel %vm216, %v719, %v720
    %v730 = vsel %vm216, %v718, %v719
    %v731 = vsel %vm216, %v717, %v718
    %v732 = vsel %vm216, %v724, %v717
    %v733 = vsel %vm233, %v732, 0.0
    %v734 = vsel %vm234, %v731, 0.0
    %v735 = vsel %vm235, %v730, 0.0
    %v736 = vsel %vm236, %v729, 0.0
    %v737 = vsel %vm237, %v728, 0.0
    %v738 = vsel %vm238, %v727, 0.0
    %v739 = vsel %vm239, %v726, 0.0
    %v740 = vsel %vm240, %v725, 0.0
    %v741 = vrot.slane %v709, 1
    %v742 = vrot.slane %v710, 1
    %v743 = vrot.slane %v711, 1
    %v744 = vrot.slane %v712, 1
    %v745 = vrot.slane %v713, 1
    %v746 = vrot.slane %v714, 1
    %v747 = vrot.slane %v715, 1
    %v748 = vrot.slane %v716, 1
    %v749 = vsel %vm257, %v747, %v748
    %v750 = vsel %vm257, %v746, %v747
    %v751 = vsel %vm257, %v745, %v746
    %v752 = vsel %vm257, %v744, %v745
    %v753 = vsel %vm257, %v743, %v744
    %v754 = vsel %vm257, %v742, %v743
    %v755 = vsel %vm257, %v741, %v742
    %v756 = vsel %vm257, %v748, %v741
    %v757 = vsel %vm274, %v755, 0.0
    %v758 = vsel %vm275, %v754, 0.0
    %v759 = vsel %vm276, %v753, 0.0
    %v760 = vsel %vm277, %v752, 0.0
    %v761 = vsel %vm278, %v751, 0.0
    %v762 = vsel %vm279, %v750, 0.0
    %v763 = vsel %vm280, %v749, 0.0
    %v764 = vsel %vm281, %v756, 0.0
    %v765 = vld [vmem:[#allocation5 + $0xc] sm:$0x1]
    %v766 = vperm.slane %v765, 0
    %v767 = vmul.f32 %v766, %v733
    %v768 = vmul.f32 %v766, %v734
    %v769 = vmul.f32 %v766, %v735
    %v770 = vmul.f32 %v766, %v736
    %v771 = vmul.f32 %v766, %v737
    %v772 = vmul.f32 %v766, %v738
    %v773 = vmul.f32 %v766, %v739
    %v774 = vmul.f32 %v766, %v740
    %v775 = vld [vmem:[#allocation5 + $0xd] sm:$0x1]
    %v776 = vperm.slane %v775, 0
    %v777 = vmul.f32 %v776, %v709
    %v778 = vmul.f32 %v776, %v710
    %v779 = vmul.f32 %v776, %v711
    %v780 = vmul.f32 %v776, %v712
    %v781 = vmul.f32 %v776, %v713
    %v782 = vmul.f32 %v776, %v714
    %v783 = vmul.f32 %v776, %v715
    %v784 = vmul.f32 %v776, %v716
    %v785 = vadd.f32 %v767, %v777
    %v786 = vadd.f32 %v768, %v778
    %v787 = vadd.f32 %v769, %v779
    %v788 = vadd.f32 %v770, %v780
    %v789 = vadd.f32 %v771, %v781
    %v790 = vadd.f32 %v772, %v782
    %v791 = vadd.f32 %v773, %v783
    %v792 = vadd.f32 %v774, %v784
    %v793 = vld [vmem:[#allocation5 + $0xe] sm:$0x1]
    %v794 = vperm.slane %v793, 0
    %v795 = vmul.f32 %v794, %v757
    %v796 = vmul.f32 %v794, %v758
    %v797 = vmul.f32 %v794, %v759
    %v798 = vmul.f32 %v794, %v760
    %v799 = vmul.f32 %v794, %v761
    %v800 = vmul.f32 %v794, %v762
    %v801 = vmul.f32 %v794, %v763
    %v802 = vmul.f32 %v794, %v764
    %v803 = vadd.f32 %v785, %v795
    %v804 = vadd.f32 %v786, %v796
    %v805 = vadd.f32 %v787, %v797
    %v806 = vadd.f32 %v788, %v798
    %v807 = vadd.f32 %v789, %v799
    %v808 = vadd.f32 %v790, %v800
    %v809 = vadd.f32 %v791, %v801
    %v810 = vadd.f32 %v792, %v802
    %v811 = vld [vmem:[#allocation5 + $0xf] sm:$0x1]
    %v812 = vperm.slane %v811, 0
    %v813 = vadd.f32 %v803, %v812
    %v814 = vadd.f32 %v804, %v812
    %v815 = vadd.f32 %v805, %v812
    %v816 = vadd.f32 %v806, %v812
    %v817 = vadd.f32 %v807, %v812
    %v818 = vadd.f32 %v808, %v812
    %v819 = vadd.f32 %v809, %v812
    %v820 = vadd.f32 %v810, %v812
    %v821 = vadd.f32 %v346, %v813
    %v822 = vadd.f32 %v347, %v814
    %v823 = vadd.f32 %v348, %v815
    %v824 = vadd.f32 %v349, %v816
    %v825 = vadd.f32 %v350, %v817
    %v826 = vadd.f32 %v351, %v818
    %v827 = vadd.f32 %v352, %v819
    %v828 = vadd.f32 %v353, %v820
    %v829 = vpack.c.bf16 %v120, %v119
    %v830 = vpack.c.bf16 %v122, %v121
    %v831 = vpack.c.bf16 %v124, %v123
    %v832 = vpack.c.bf16 %v126, %v125
    %v833 = vld [vmem:[#allocation7] sm:$0xff]
    %v834 = vld [vmem:[#allocation7 + $0x8] sm:$0xff]
    %v835 = vld [vmem:[#allocation7 + $0x10] sm:$0xff]
    %v836 = vld [vmem:[#allocation7 + $0x18] sm:$0xff]
    %v837 = vld [vmem:[#allocation7 + $0x20] sm:$0xff]
    %v838 = vld [vmem:[#allocation7 + $0x28] sm:$0xff]
    %v839 = vld [vmem:[#allocation7 + $0x30] sm:$0xff]
    %v840 = vld [vmem:[#allocation7 + $0x38] sm:$0xff]
    %v841 = vld [vmem:[#allocation7 + $0x40] sm:$0xff]
    %v842 = vld [vmem:[#allocation7 + $0x48] sm:$0xff]
    %v843 = vld [vmem:[#allocation7 + $0x50] sm:$0xff]
    %v844 = vld [vmem:[#allocation7 + $0x58] sm:$0xff]
    %v845 = vld [vmem:[#allocation7 + $0x60] sm:$0xff]
    %v846 = vld [vmem:[#allocation7 + $0x68] sm:$0xff]
    %v847 = vld [vmem:[#allocation7 + $0x70] sm:$0xff]
    %v848 = vld [vmem:[#allocation7 + $0x78] sm:$0xff]
    %v849 = vld [vmem:[#allocation7 + $0x80] sm:$0xff]
    %v850 = vld [vmem:[#allocation7 + $0x88] sm:$0xff]
    %v851 = vld [vmem:[#allocation7 + $0x90] sm:$0xff]
    %v852 = vld [vmem:[#allocation7 + $0x98] sm:$0xff]
    %v853 = vld [vmem:[#allocation7 + $0xa0] sm:$0xff]
    %v854 = vld [vmem:[#allocation7 + $0xa8] sm:$0xff]
    %v855 = vld [vmem:[#allocation7 + $0xb0] sm:$0xff]
    %v856 = vld [vmem:[#allocation7 + $0xb8] sm:$0xff]
    %v857 = vld [vmem:[#allocation7 + $0xc0] sm:$0xff]
    %v858 = vld [vmem:[#allocation7 + $0xc8] sm:$0xff]
    %v859 = vld [vmem:[#allocation7 + $0xd0] sm:$0xff]
    %v860 = vld [vmem:[#allocation7 + $0xd8] sm:$0xff]
    %v861 = vld [vmem:[#allocation7 + $0xe0] sm:$0xff]
    %v862 = vld [vmem:[#allocation7 + $0xe8] sm:$0xff]
    %v863 = vld [vmem:[#allocation7 + $0xf0] sm:$0xff]
    %v864 = vld [vmem:[#allocation7 + $0xf8] sm:$0xff]
    %v897 = vunpack.c.l.b16 %v833
    %v898 = vunpack.c.h.b16 %v833
    %v899 = vunpack.c.l.b16 %v834
    %v900 = vunpack.c.h.b16 %v834
    %v901 = vunpack.c.l.b16 %v835
    %v902 = vunpack.c.h.b16 %v835
    %v903 = vunpack.c.l.b16 %v836
    %v904 = vunpack.c.h.b16 %v836
    %v905 = vunpack.c.l.b16 %v837
    %v906 = vunpack.c.h.b16 %v837
    %v907 = vunpack.c.l.b16 %v838
    %v908 = vunpack.c.h.b16 %v838
    %v909 = vunpack.c.l.b16 %v839
    %v910 = vunpack.c.h.b16 %v839
    %v911 = vunpack.c.l.b16 %v840
    %v912 = vunpack.c.h.b16 %v840
    %v913 = vunpack.c.l.b16 %v841
    %v914 = vunpack.c.h.b16 %v841
    %v915 = vunpack.c.l.b16 %v842
    %v916 = vunpack.c.h.b16 %v842
    %v917 = vunpack.c.l.b16 %v843
    %v918 = vunpack.c.h.b16 %v843
    %v919 = vunpack.c.l.b16 %v844
    %v920 = vunpack.c.h.b16 %v844
    %v921 = vunpack.c.l.b16 %v845
    %v922 = vunpack.c.h.b16 %v845
    %v923 = vunpack.c.l.b16 %v846
    %v924 = vunpack.c.h.b16 %v846
    %v925 = vunpack.c.l.b16 %v847
    %v926 = vunpack.c.h.b16 %v847
    %v927 = vunpack.c.l.b16 %v848
    %v928 = vunpack.c.h.b16 %v848
    %v929 = vunpack.c.l.b16 %v849
    %v930 = vunpack.c.h.b16 %v849
    %v931 = vunpack.c.l.b16 %v850
    %v932 = vunpack.c.h.b16 %v850
    %v933 = vunpack.c.l.b16 %v851
    %v934 = vunpack.c.h.b16 %v851
    %v935 = vunpack.c.l.b16 %v852
    %v936 = vunpack.c.h.b16 %v852
    %v937 = vunpack.c.l.b16 %v853
    %v938 = vunpack.c.h.b16 %v853
    %v939 = vunpack.c.l.b16 %v854
    %v940 = vunpack.c.h.b16 %v854
    %v941 = vunpack.c.l.b16 %v855
    %v942 = vunpack.c.h.b16 %v855
    %v943 = vunpack.c.l.b16 %v856
    %v944 = vunpack.c.h.b16 %v856
    %v945 = vunpack.c.l.b16 %v857
    %v946 = vunpack.c.h.b16 %v857
    %v947 = vunpack.c.l.b16 %v858
    %v948 = vunpack.c.h.b16 %v858
    %v949 = vunpack.c.l.b16 %v859
    %v950 = vunpack.c.h.b16 %v859
    %v951 = vunpack.c.l.b16 %v860
    %v952 = vunpack.c.h.b16 %v860
    %v953 = vunpack.c.l.b16 %v861
    %v954 = vunpack.c.h.b16 %v861
    %v955 = vunpack.c.l.b16 %v862
    %v956 = vunpack.c.h.b16 %v862
    %v957 = vunpack.c.l.b16 %v863
    %v958 = vunpack.c.h.b16 %v863
    %v959 = vunpack.c.l.b16 %v864
    %v960 = vunpack.c.h.b16 %v864
    %v961 = vpack.c.b16 %v901, %v897
    %v962 = vpack.c.b16 %v902, %v898
    %v963 = vpack.c.b16 %v903, %v899
    %v964 = vpack.c.b16 %v904, %v900
    %v965 = vpack.c.b16 %v909, %v905
    %v966 = vpack.c.b16 %v910, %v906
    %v967 = vpack.c.b16 %v911, %v907
    %v968 = vpack.c.b16 %v912, %v908
    %v969 = vpack.c.b16 %v917, %v913
    %v970 = vpack.c.b16 %v918, %v914
    %v971 = vpack.c.b16 %v919, %v915
    %v972 = vpack.c.b16 %v920, %v916
    %v973 = vpack.c.b16 %v925, %v921
    %v974 = vpack.c.b16 %v926, %v922
    %v975 = vpack.c.b16 %v927, %v923
    %v976 = vpack.c.b16 %v928, %v924
    %v977 = vpack.c.b16 %v933, %v929
    %v978 = vpack.c.b16 %v934, %v930
    %v979 = vpack.c.b16 %v935, %v931
    %v980 = vpack.c.b16 %v936, %v932
    %v981 = vpack.c.b16 %v941, %v937
    %v982 = vpack.c.b16 %v942, %v938
    %v983 = vpack.c.b16 %v943, %v939
    %v984 = vpack.c.b16 %v944, %v940
    %v985 = vpack.c.b16 %v949, %v945
    %v986 = vpack.c.b16 %v950, %v946
    %v987 = vpack.c.b16 %v951, %v947
    %v988 = vpack.c.b16 %v952, %v948
    %v989 = vpack.c.b16 %v957, %v953
    %v990 = vpack.c.b16 %v958, %v954
    %v991 = vpack.c.b16 %v959, %v955
    %v992 = vpack.c.b16 %v960, %v956
    %1025 = vmatpush.bf16.msra.mxu0 %v989
    %1026 = vmatpush.bf16.msra.mxu0 %v985
    %1027 = vmatpush.bf16.msra.mxu0 %v981
    %1028 = vmatpush.bf16.msra.mxu0 %v977
    %1029 = vmatpush.bf16.msra.mxu0 %v973
    %1030 = vmatpush.bf16.msra.mxu0 %v969
    %1031 = vmatpush.bf16.msra.mxu0 %v965
    %1032 = vmatpush.bf16.msra.mxu0 %v961
    %1033 = vmatmul.bf16.gmra.mxu0 %v829
    %v1034 = vpop.f32.mrf.mxu0
    %v1035 = vadd.f32 0.0, %v1034
    %v1036 = vpop.f32.mrf.mxu0
    %v1037 = vadd.f32 0.0, %v1036
    %1038 = vmatmul.bf16.gmra.mxu0 %v830
    %v1039 = vpop.f32.mrf.mxu0
    %v1040 = vadd.f32 0.0, %v1039
    %v1041 = vpop.f32.mrf.mxu0
    %v1042 = vadd.f32 0.0, %v1041
    %1043 = vmatmul.bf16.gmra.mxu0 %v831
    %v1044 = vpop.f32.mrf.mxu0
    %v1045 = vadd.f32 0.0, %v1044
    %v1046 = vpop.f32.mrf.mxu0
    %v1047 = vadd.f32 0.0, %v1046
    %1048 = vmatmul.bf16.gmra.mxu0 %v832
    %v1049 = vpop.f32.mrf.mxu0
    %v1050 = vadd.f32 0.0, %v1049
    %v1051 = vpop.f32.mrf.mxu0
    %v1052 = vadd.f32 0.0, %v1051
    %1053 = vdwg.mxu0
    %1054 = vmatpush.bf16.msra.mxu0 %v990
    %1055 = vmatpush.bf16.msra.mxu0 %v986
    %1056 = vmatpush.bf16.msra.mxu0 %v982
    %1057 = vmatpush.bf16.msra.mxu0 %v978
    %1058 = vmatpush.bf16.msra.mxu0 %v974
    %1059 = vmatpush.bf16.msra.mxu0 %v970
    %1060 = vmatpush.bf16.msra.mxu0 %v966
    %1061 = vmatpush.bf16.msra.mxu0 %v962
    %1062 = vmatmul.bf16.gmra.mxu0 %v829
    %v1063 = vpop.f32.mrf.mxu0
    %v1064 = vadd.f32 0.0, %v1063
    %v1065 = vpop.f32.mrf.mxu0
    %v1066 = vadd.f32 0.0, %v1065
    %1067 = vmatmul.bf16.gmra.mxu0 %v830
    %v1068 = vpop.f32.mrf.mxu0
    %v1069 = vadd.f32 0.0, %v1068
    %v1070 = vpop.f32.mrf.mxu0
    %v1071 = vadd.f32 0.0, %v1070
    %1072 = vmatmul.bf16.gmra.mxu0 %v831
    %v1073 = vpop.f32.mrf.mxu0
    %v1074 = vadd.f32 0.0, %v1073
    %v1075 = vpop.f32.mrf.mxu0
    %v1076 = vadd.f32 0.0, %v1075
    %1077 = vmatmul.bf16.gmra.mxu0 %v832
    %v1078 = vpop.f32.mrf.mxu0
    %v1079 = vadd.f32 0.0, %v1078
    %v1080 = vpop.f32.mrf.mxu0
    %v1081 = vadd.f32 0.0, %v1080
    %1082 = vdwg.mxu0
    %1083 = vmatpush.bf16.msra.mxu0 %v991
    %1084 = vmatpush.bf16.msra.mxu0 %v987
    %1085 = vmatpush.bf16.msra.mxu0 %v983
    %1086 = vmatpush.bf16.msra.mxu0 %v979
    %1087 = vmatpush.bf16.msra.mxu0 %v975
    %1088 = vmatpush.bf16.msra.mxu0 %v971
    %1089 = vmatpush.bf16.msra.mxu0 %v967
    %1090 = vmatpush.bf16.msra.mxu0 %v963
    %1091 = vmatmul.bf16.gmra.mxu0 %v829
    %v1092 = vpop.f32.mrf.mxu0
    %v1093 = vadd.f32 0.0, %v1092
    %v1094 = vpop.f32.mrf.mxu0
    %v1095 = vadd.f32 0.0, %v1094
    %1096 = vmatmul.bf16.gmra.mxu0 %v830
    %v1097 = vpop.f32.mrf.mxu0
    %v1098 = vadd.f32 0.0, %v1097
    %v1099 = vpop.f32.mrf.mxu0
    %v1100 = vadd.f32 0.0, %v1099
    %1101 = vmatmul.bf16.gmra.mxu0 %v831
    %v1102 = vpop.f32.mrf.mxu0
    %v1103 = vadd.f32 0.0, %v1102
    %v1104 = vpop.f32.mrf.mxu0
    %v1105 = vadd.f32 0.0, %v1104
    %1106 = vmatmul.bf16.gmra.mxu0 %v832
    %v1107 = vpop.f32.mrf.mxu0
    %v1108 = vadd.f32 0.0, %v1107
    %v1109 = vpop.f32.mrf.mxu0
    %v1110 = vadd.f32 0.0, %v1109
    %1111 = vdwg.mxu0
    %1112 = vmatpush.bf16.msra.mxu0 %v992
    %1113 = vmatpush.bf16.msra.mxu0 %v988
    %1114 = vmatpush.bf16.msra.mxu0 %v984
    %1115 = vmatpush.bf16.msra.mxu0 %v980
    %1116 = vmatpush.bf16.msra.mxu0 %v976
    %1117 = vmatpush.bf16.msra.mxu0 %v972
    %1118 = vmatpush.bf16.msra.mxu0 %v968
    %1119 = vmatpush.bf16.msra.mxu0 %v964
    %1120 = vmatmul.bf16.gmra.mxu0 %v829
    %v1121 = vpop.f32.mrf.mxu0
    %v1122 = vadd.f32 0.0, %v1121
    %v1123 = vpop.f32.mrf.mxu0
    %v1124 = vadd.f32 0.0, %v1123
    %1125 = vmatmul.bf16.gmra.mxu0 %v830
    %v1126 = vpop.f32.mrf.mxu0
    %v1127 = vadd.f32 0.0, %v1126
    %v1128 = vpop.f32.mrf.mxu0
    %v1129 = vadd.f32 0.0, %v1128
    %1130 = vmatmul.bf16.gmra.mxu0 %v831
    %v1131 = vpop.f32.mrf.mxu0
    %v1132 = vadd.f32 0.0, %v1131
    %v1133 = vpop.f32.mrf.mxu0
    %v1134 = vadd.f32 0.0, %v1133
    %1135 = vmatmul.bf16.gmra.mxu0 %v832
    %v1136 = vpop.f32.mrf.mxu0
    %v1137 = vadd.f32 0.0, %v1136
    %v1138 = vpop.f32.mrf.mxu0
    %v1139 = vadd.f32 0.0, %v1138
    %1140 = vdwg.mxu0
    %v1141 = vld [vmem:[#allocation5 + $0x4] sm:$0x1]
    %v1142 = vperm.slane %v1141, 0
    %v1143 = vadd.f32 %v1035, %v1142
    %v1144 = vadd.f32 %v1037, %v1142
    %v1145 = vadd.f32 %v1040, %v1142
    %v1146 = vadd.f32 %v1042, %v1142
    %v1147 = vadd.f32 %v1045, %v1142
    %v1148 = vadd.f32 %v1047, %v1142
    %v1149 = vadd.f32 %v1050, %v1142
    %v1150 = vadd.f32 %v1052, %v1142
    %v1151 = vmul.f32 %v1143, 0.5
    %v1152 = vmul.f32 %v1144, 0.5
    %v1153 = vmul.f32 %v1145, 0.5
    %v1154 = vmul.f32 %v1146, 0.5
    %v1155 = vmul.f32 %v1147, 0.5
    %v1156 = vmul.f32 %v1148, 0.5
    %v1157 = vmul.f32 %v1149, 0.5
    %v1158 = vmul.f32 %v1150, 0.5
    %v1159 = vmul.f32 %v1143, 0.044715
    %v1160 = vmul.f32 %v1144, 0.044715
    %v1161 = vmul.f32 %v1145, 0.044715
    %v1162 = vmul.f32 %v1146, 0.044715
    %v1163 = vmul.f32 %v1147, 0.044715
    %v1164 = vmul.f32 %v1148, 0.044715
    %v1165 = vmul.f32 %v1149, 0.044715
    %v1166 = vmul.f32 %v1150, 0.044715
    %v1167 = vmul.f32 %v1159, %v1143
    %v1168 = vmul.f32 %v1160, %v1144
    %v1169 = vmul.f32 %v1161, %v1145
    %v1170 = vmul.f32 %v1162, %v1146
    %v1171 = vmul.f32 %v1163, %v1147
    %v1172 = vmul.f32 %v1164, %v1148
    %v1173 = vmul.f32 %v1165, %v1149
    %v1174 = vmul.f32 %v1166, %v1150
    %v1175 = vmul.f32 %v1167, %v1143
    %v1176 = vmul.f32 %v1168, %v1144
    %v1177 = vmul.f32 %v1169, %v1145
    %v1178 = vmul.f32 %v1170, %v1146
    %v1179 = vmul.f32 %v1171, %v1147
    %v1180 = vmul.f32 %v1172, %v1148
    %v1181 = vmul.f32 %v1173, %v1149
    %v1182 = vmul.f32 %v1174, %v1150
    %v1183 = vadd.f32 %v1143, %v1175
    %v1184 = vadd.f32 %v1144, %v1176
    %v1185 = vadd.f32 %v1145, %v1177
    %v1186 = vadd.f32 %v1146, %v1178
    %v1187 = vadd.f32 %v1147, %v1179
    %v1188 = vadd.f32 %v1148, %v1180
    %v1189 = vadd.f32 %v1149, %v1181
    %v1190 = vadd.f32 %v1150, %v1182
    %v1191 = vmul.f32 %v1183, 0.7978846
    %v1192 = vmul.f32 %v1184, 0.7978846
    %v1193 = vmul.f32 %v1185, 0.7978846
    %v1194 = vmul.f32 %v1186, 0.7978846
    %v1195 = vmul.f32 %v1187, 0.7978846
    %v1196 = vmul.f32 %v1188, 0.7978846
    %v1197 = vmul.f32 %v1189, 0.7978846
    %v1198 = vmul.f32 %v1190, 0.7978846
    %v1199 = vtanh.pop %v1191
    %v1200 = vtanh.pop %v1192
    %v1201 = vtanh.pop %v1193
    %v1202 = vtanh.pop %v1194
    %v1203 = vtanh.pop %v1195
    %v1204 = vtanh.pop %v1196
    %v1205 = vtanh.pop %v1197
    %v1206 = vtanh.pop %v1198
    %v1207 = vadd.f32 %v1199, 1.0
    %v1208 = vadd.f32 %v1200, 1.0
    %v1209 = vadd.f32 %v1201, 1.0
    %v1210 = vadd.f32 %v1202, 1.0
    %v1211 = vadd.f32 %v1203, 1.0
    %v1212 = vadd.f32 %v1204, 1.0
    %v1213 = vadd.f32 %v1205, 1.0
    %v1214 = vadd.f32 %v1206, 1.0
    %v1215 = vmul.f32 %v1151, %v1207
    %v1216 = vmul.f32 %v1152, %v1208
    %v1217 = vmul.f32 %v1153, %v1209
    %v1218 = vmul.f32 %v1154, %v1210
    %v1219 = vmul.f32 %v1155, %v1211
    %v1220 = vmul.f32 %v1156, %v1212
    %v1221 = vmul.f32 %v1157, %v1213
    %v1222 = vmul.f32 %v1158, %v1214
    %v1223 = vpack.c.bf16 %v1216, %v1215
    %v1224 = vpack.c.bf16 %v1218, %v1217
    %v1225 = vpack.c.bf16 %v1220, %v1219
    %v1226 = vpack.c.bf16 %v1222, %v1221
    %v1227 = vld [vmem:[#allocation8] sm:$0xf]
    %v1228 = vld [vmem:[#allocation8 + $0x4] sm:$0xf]
    %v1229 = vld [vmem:[#allocation8 + $0x8] sm:$0xf]
    %v1230 = vld [vmem:[#allocation8 + $0xc] sm:$0xf]
    %v1231 = vld [vmem:[#allocation8 + $0x10] sm:$0xf]
    %v1232 = vld [vmem:[#allocation8 + $0x14] sm:$0xf]
    %v1233 = vld [vmem:[#allocation8 + $0x18] sm:$0xf]
    %v1234 = vld [vmem:[#allocation8 + $0x1c] sm:$0xf]
    %v1235 = vld [vmem:[#allocation8 + $0x20] sm:$0xf]
    %v1236 = vld [vmem:[#allocation8 + $0x24] sm:$0xf]
    %v1237 = vld [vmem:[#allocation8 + $0x28] sm:$0xf]
    %v1238 = vld [vmem:[#allocation8 + $0x2c] sm:$0xf]
    %v1239 = vld [vmem:[#allocation8 + $0x30] sm:$0xf]
    %v1240 = vld [vmem:[#allocation8 + $0x34] sm:$0xf]
    %v1241 = vld [vmem:[#allocation8 + $0x38] sm:$0xf]
    %v1242 = vld [vmem:[#allocation8 + $0x3c] sm:$0xf]
    %v1259 = vunpack.c.l.b16 %v1227
    %v1260 = vunpack.c.l.b16 %v1228
    %v1261 = vunpack.c.l.b16 %v1229
    %v1262 = vunpack.c.l.b16 %v1230
    %v1263 = vunpack.c.l.b16 %v1231
    %v1264 = vunpack.c.l.b16 %v1232
    %v1265 = vunpack.c.l.b16 %v1233
    %v1266 = vunpack.c.l.b16 %v1234
    %v1267 = vunpack.c.l.b16 %v1235
    %v1268 = vunpack.c.l.b16 %v1236
    %v1269 = vunpack.c.l.b16 %v1237
    %v1270 = vunpack.c.l.b16 %v1238
    %v1271 = vunpack.c.l.b16 %v1239
    %v1272 = vunpack.c.l.b16 %v1240
    %v1273 = vunpack.c.l.b16 %v1241
    %v1274 = vunpack.c.l.b16 %v1242
    %v1275 = vpack.c.b16 %v1260, %v1259
    %v1276 = vpack.c.b16 %v1262, %v1261
    %v1277 = vpack.c.b16 %v1264, %v1263
    %v1278 = vpack.c.b16 %v1266, %v1265
    %v1279 = vpack.c.b16 %v1268, %v1267
    %v1280 = vpack.c.b16 %v1270, %v1269
    %v1281 = vpack.c.b16 %v1272, %v1271
    %v1282 = vpack.c.b16 %v1274, %v1273
    %1291 = vmatpush.bf16.msra.mxu0 %v1282
    %1292 = vmatpush.bf16.msra.mxu0 %v1281
    %1293 = vmatpush.bf16.msra.mxu0 %v1280
    %1294 = vmatpush.bf16.msra.mxu0 %v1279
    %1295 = vmatpush.bf16.msra.mxu0 %v1278
    %1296 = vmatpush.bf16.msra.mxu0 %v1277
    %1297 = vmatpush.bf16.msra.mxu0 %v1276
    %1298 = vmatpush.bf16.msra.mxu0 %v1275
    %1299 = vmatmul.bf16.gmra.mxu0 %v1223
    %v1300 = vpop.f32.mrf.mxu0
    %v1301 = vadd.f32 0.0, %v1300
    %v1302 = vpop.f32.mrf.mxu0
    %v1303 = vadd.f32 0.0, %v1302
    %1304 = vmatmul.bf16.gmra.mxu0 %v1224
    %v1305 = vpop.f32.mrf.mxu0
    %v1306 = vadd.f32 0.0, %v1305
    %v1307 = vpop.f32.mrf.mxu0
    %v1308 = vadd.f32 0.0, %v1307
    %1309 = vmatmul.bf16.gmra.mxu0 %v1225
    %v1310 = vpop.f32.mrf.mxu0
    %v1311 = vadd.f32 0.0, %v1310
    %v1312 = vpop.f32.mrf.mxu0
    %v1313 = vadd.f32 0.0, %v1312
    %1314 = vmatmul.bf16.gmra.mxu0 %v1226
    %v1315 = vpop.f32.mrf.mxu0
    %v1316 = vadd.f32 0.0, %v1315
    %v1317 = vpop.f32.mrf.mxu0
    %v1318 = vadd.f32 0.0, %v1317
    %1319 = vdwg.mxu0
    %v1320 = vadd.f32 %v821, %v1301
    %v1321 = vadd.f32 %v822, %v1303
    %v1322 = vadd.f32 %v823, %v1306
    %v1323 = vadd.f32 %v824, %v1308
    %v1324 = vadd.f32 %v825, %v1311
    %v1325 = vadd.f32 %v826, %v1313
    %v1326 = vadd.f32 %v827, %v1316
    %v1327 = vadd.f32 %v828, %v1318
    %v1328 = vld [vmem:[#allocation5 + $0x5] sm:$0x1]
    %v1329 = vperm.slane %v1328, 0
    %v1330 = vadd.f32 %v1320, %v1329
    %v1331 = vadd.f32 %v1321, %v1329
    %v1332 = vadd.f32 %v1322, %v1329
    %v1333 = vadd.f32 %v1323, %v1329
    %v1334 = vadd.f32 %v1324, %v1329
    %v1335 = vadd.f32 %v1325, %v1329
    %v1336 = vadd.f32 %v1326, %v1329
    %v1337 = vadd.f32 %v1327, %v1329
    %v1338 = vld [vmem:[#allocation5 + $0x10] sm:$0x1]
    %v1339 = vperm.slane %v1338, 0
    %v1340 = vadd.f32 %v1064, %v1339
    %v1341 = vadd.f32 %v1066, %v1339
    %v1342 = vadd.f32 %v1069, %v1339
    %v1343 = vadd.f32 %v1071, %v1339
    %v1344 = vadd.f32 %v1074, %v1339
    %v1345 = vadd.f32 %v1076, %v1339
    %v1346 = vadd.f32 %v1079, %v1339
    %v1347 = vadd.f32 %v1081, %v1339
    %v1348 = vld [vmem:[#allocation5 + $0x11] sm:$0x1]
    %v1349 = vperm.slane %v1348, 0
    %v1350 = vadd.f32 %v1093, %v1349
    %v1351 = vadd.f32 %v1095, %v1349
    %v1352 = vadd.f32 %v1098, %v1349
    %v1353 = vadd.f32 %v1100, %v1349
    %v1354 = vadd.f32 %v1103, %v1349
    %v1355 = vadd.f32 %v1105, %v1349
    %v1356 = vadd.f32 %v1108, %v1349
    %v1357 = vadd.f32 %v1110, %v1349
    %vm1358 = vcmp.gt.f32.partialorder %v1340, 0.0
    %vm1359 = vcmp.gt.f32.partialorder %v1341, 0.0
    %vm1360 = vcmp.gt.f32.partialorder %v1342, 0.0
    %vm1361 = vcmp.gt.f32.partialorder %v1343, 0.0
    %vm1362 = vcmp.gt.f32.partialorder %v1344, 0.0
    %vm1363 = vcmp.gt.f32.partialorder %v1345, 0.0
    %vm1364 = vcmp.gt.f32.partialorder %v1346, 0.0
    %vm1365 = vcmp.gt.f32.partialorder %v1347, 0.0
    %v1366 = vadd.f32 %v1340, 1.0
    %v1367 = vadd.f32 %v1341, 1.0
    %v1368 = vadd.f32 %v1342, 1.0
    %v1369 = vadd.f32 %v1343, 1.0
    %v1370 = vadd.f32 %v1344, 1.0
    %v1371 = vadd.f32 %v1345, 1.0
    %v1372 = vadd.f32 %v1346, 1.0
    %v1373 = vadd.f32 %v1347, 1.0
    %v1374 = vmul.f32 %v1340, 1.442695
    %v1375 = vpow.pop %v1374
    %v1376 = vmul.f32 %v1341, 1.442695
    %v1377 = vpow.pop %v1376
    %v1378 = vmul.f32 %v1342, 1.442695
    %v1379 = vpow.pop %v1378
    %v1380 = vmul.f32 %v1343, 1.442695
    %v1381 = vpow.pop %v1380
    %v1382 = vmul.f32 %v1344, 1.442695
    %v1383 = vpow.pop %v1382
    %v1384 = vmul.f32 %v1345, 1.442695
    %v1385 = vpow.pop %v1384
    %v1386 = vmul.f32 %v1346, 1.442695
    %v1387 = vpow.pop %v1386
    %v1388 = vmul.f32 %v1347, 1.442695
    %v1389 = vpow.pop %v1388
    %v1390 = vsel %vm1358, %v1366, %v1375
    %v1391 = vsel %vm1359, %v1367, %v1377
    %v1392 = vsel %vm1360, %v1368, %v1379
    %v1393 = vsel %vm1361, %v1369, %v1381
    %v1394 = vsel %vm1362, %v1370, %v1383
    %v1395 = vsel %vm1363, %v1371, %v1385
    %v1396 = vsel %vm1364, %v1372, %v1387
    %v1397 = vsel %vm1365, %v1373, %v1389
    %vm1398 = vcmp.gt.f32.partialorder %v1350, 0.0
    %vm1399 = vcmp.gt.f32.partialorder %v1351, 0.0
    %vm1400 = vcmp.gt.f32.partialorder %v1352, 0.0
    %vm1401 = vcmp.gt.f32.partialorder %v1353, 0.0
    %vm1402 = vcmp.gt.f32.partialorder %v1354, 0.0
    %vm1403 = vcmp.gt.f32.partialorder %v1355, 0.0
    %vm1404 = vcmp.gt.f32.partialorder %v1356, 0.0
    %vm1405 = vcmp.gt.f32.partialorder %v1357, 0.0
    %v1406 = vadd.f32 %v1350, 1.0
    %v1407 = vadd.f32 %v1351, 1.0
    %v1408 = vadd.f32 %v1352, 1.0
    %v1409 = vadd.f32 %v1353, 1.0
    %v1410 = vadd.f32 %v1354, 1.0
    %v1411 = vadd.f32 %v1355, 1.0
    %v1412 = vadd.f32 %v1356, 1.0
    %v1413 = vadd.f32 %v1357, 1.0
    %v1414 = vmul.f32 %v1350, 1.442695
    %v1415 = vpow.pop %v1414
    %v1416 = vmul.f32 %v1351, 1.442695
    %v1417 = vpow.pop %v1416
    %v1418 = vmul.f32 %v1352, 1.442695
    %v1419 = vpow.pop %v1418
    %v1420 = vmul.f32 %v1353, 1.442695
    %v1421 = vpow.pop %v1420
    %v1422 = vmul.f32 %v1354, 1.442695
    %v1423 = vpow.pop %v1422
    %v1424 = vmul.f32 %v1355, 1.442695
    %v1425 = vpow.pop %v1424
    %v1426 = vmul.f32 %v1356, 1.442695
    %v1427 = vpow.pop %v1426
    %v1428 = vmul.f32 %v1357, 1.442695
    %v1429 = vpow.pop %v1428
    %v1430 = vsel %vm1398, %v1406, %v1415
    %v1431 = vsel %vm1399, %v1407, %v1417
    %v1432 = vsel %vm1400, %v1408, %v1419
    %v1433 = vsel %vm1401, %v1409, %v1421
    %v1434 = vsel %vm1402, %v1410, %v1423
    %v1435 = vsel %vm1403, %v1411, %v1425
    %v1436 = vsel %vm1404, %v1412, %v1427
    %v1437 = vsel %vm1405, %v1413, %v1429
    %v1438 = vld [vmem:[#allocation5 + $0x12] sm:$0x1]
    %v1439 = vperm.slane %v1438, 0
    %v1440 = vadd.f32 %v1122, %v1439
    %v1441 = vadd.f32 %v1124, %v1439
    %v1442 = vadd.f32 %v1127, %v1439
    %v1443 = vadd.f32 %v1129, %v1439
    %v1444 = vadd.f32 %v1132, %v1439
    %v1445 = vadd.f32 %v1134, %v1439
    %v1446 = vadd.f32 %v1137, %v1439
    %v1447 = vadd.f32 %v1139, %v1439
    %v1448 = vpack.c.bf16 %v1430, %v1430
    %v1449 = vpack.c.bf16 %v1431, %v1431
    %v1450 = vpack.c.bf16 %v1432, %v1432
    %v1451 = vpack.c.bf16 %v1433, %v1433
    %v1452 = vpack.c.bf16 %v1434, %v1434
    %v1453 = vpack.c.bf16 %v1435, %v1435
    %v1454 = vpack.c.bf16 %v1436, %v1436
    %v1455 = vpack.c.bf16 %v1437, %v1437
    %v1456 = vpack.c.bf16 %v1440, %v1440
    %v1457 = vpack.c.bf16 %v1441, %v1441
    %v1458 = vpack.c.bf16 %v1442, %v1442
    %v1459 = vpack.c.bf16 %v1443, %v1443
    %v1460 = vpack.c.bf16 %v1444, %v1444
    %v1461 = vpack.c.bf16 %v1445, %v1445
    %v1462 = vpack.c.bf16 %v1446, %v1446
    %v1463 = vpack.c.bf16 %v1447, %v1447
    %v1466 = vunpack.c.l.b16 %v1448
    %v1467 = vunpack.c.l.b16 %v1449
    %v1468 = vpack.c.b16 %v1467, %v1466
    %1470 = vxpose.xlu0.c.b16.start [1/8] %v1468, 128
    %1471 = vxpose.xlu0.c.b16.cont [2/8] 0, 128
    %1472 = vxpose.xlu0.c.b16.cont [3/8] 0, 128
    %1473 = vxpose.xlu0.c.b16.cont [4/8] 0, 128
    %1474 = vxpose.xlu0.c.b16.cont [5/8] 0, 128
    %1475 = vxpose.xlu0.c.b16.cont [6/8] 0, 128
    %1476 = vxpose.xlu0.c.b16.cont [7/8] 0, 128
    %1477 = vxpose.xlu0.c.b16.end [8/8] 0, 128
    %v1478 = vpop.trf.xlu0
    %v1479 = vpop.trf.xlu0
    %v1480 = vpop.trf.xlu0
    %v1481 = vpop.trf.xlu0
    %v1482 = vpop.trf.xlu0
    %v1483 = vpop.trf.xlu0
    %v1484 = vpop.trf.xlu0
    %v1485 = vpop.trf.xlu0
    %v1488 = vunpack.c.l.b16 %v1456
    %v1489 = vunpack.c.l.b16 %v1457
    %v1490 = vpack.c.b16 %v1489, %v1488
    %vm1492 = vcmask 130048
    %v1494 = vsel %vm1492, %v1478, 0
    %v1497 = vsel %vm1492, %v1479, 0
    %v1500 = vsel %vm1492, %v1480, 0
    %v1503 = vsel %vm1492, %v1481, 0
    %v1506 = vsel %vm1492, %v1482, 0
    %v1509 = vsel %vm1492, %v1483, 0
    %v1512 = vsel %vm1492, %v1484, 0
    %v1515 = vsel %vm1492, %v1485, 0
    %1517 = vmatpush.bf16.msra.mxu0 0
    %1518 = vmatpush.bf16.msra.mxu0 0
    %1519 = vmatpush.bf16.msra.mxu0 0
    %1520 = vmatpush.bf16.msra.mxu0 0
    %1521 = vmatpush.bf16.msra.mxu0 0
    %1522 = vmatpush.bf16.msra.mxu0 0
    %1523 = vmatpush.bf16.msra.mxu0 0
    %1524 = vmatpush.bf16.msra.mxu0 %v1490
    %1525 = vmatmul.bf16.gmra.mxu0 %v1494
    %v1526 = vpop.f32.mrf.mxu0
    %v1527 = vadd.f32 0.0, %v1526
    %v1528 = vpop.f32.mrf.mxu0
    %v1529 = vadd.f32 0.0, %v1528
    %1530 = vmatmul.bf16.gmra.mxu0 %v1497
    %v1531 = vpop.f32.mrf.mxu0
    %v1532 = vadd.f32 0.0, %v1531
    %v1533 = vpop.f32.mrf.mxu0
    %v1534 = vadd.f32 0.0, %v1533
    %1535 = vmatmul.bf16.gmra.mxu0 %v1500
    %v1536 = vpop.f32.mrf.mxu0
    %v1537 = vadd.f32 0.0, %v1536
    %v1538 = vpop.f32.mrf.mxu0
    %v1539 = vadd.f32 0.0, %v1538
    %1540 = vmatmul.bf16.gmra.mxu0 %v1503
    %v1541 = vpop.f32.mrf.mxu0
    %v1542 = vadd.f32 0.0, %v1541
    %v1543 = vpop.f32.mrf.mxu0
    %v1544 = vadd.f32 0.0, %v1543
    %1545 = vmatmul.bf16.gmra.mxu0 %v1506
    %v1546 = vpop.f32.mrf.mxu0
    %v1547 = vadd.f32 0.0, %v1546
    %v1548 = vpop.f32.mrf.mxu0
    %v1549 = vadd.f32 0.0, %v1548
    %1550 = vmatmul.bf16.gmra.mxu0 %v1509
    %v1551 = vpop.f32.mrf.mxu0
    %v1552 = vadd.f32 0.0, %v1551
    %v1553 = vpop.f32.mrf.mxu0
    %v1554 = vadd.f32 0.0, %v1553
    %1555 = vmatmul.bf16.gmra.mxu0 %v1512
    %v1556 = vpop.f32.mrf.mxu0
    %v1557 = vadd.f32 0.0, %v1556
    %v1558 = vpop.f32.mrf.mxu0
    %v1559 = vadd.f32 0.0, %v1558
    %1560 = vmatmul.bf16.gmra.mxu0 %v1515
    %v1561 = vpop.f32.mrf.mxu0
    %v1562 = vadd.f32 0.0, %v1561
    %v1563 = vpop.f32.mrf.mxu0
    %v1564 = vadd.f32 0.0, %v1563
    %1565 = vdwg.mxu0
    %v1568 = vunpack.c.l.b16 %v1450
    %v1569 = vunpack.c.l.b16 %v1451
    %v1570 = vpack.c.b16 %v1569, %v1568
    %1572 = vxpose.xlu0.c.b16.start [1/8] %v1570, 128
    %1573 = vxpose.xlu0.c.b16.cont [2/8] 0, 128
    %1574 = vxpose.xlu0.c.b16.cont [3/8] 0, 128
    %1575 = vxpose.xlu0.c.b16.cont [4/8] 0, 128
    %1576 = vxpose.xlu0.c.b16.cont [5/8] 0, 128
    %1577 = vxpose.xlu0.c.b16.cont [6/8] 0, 128
    %1578 = vxpose.xlu0.c.b16.cont [7/8] 0, 128
    %1579 = vxpose.xlu0.c.b16.end [8/8] 0, 128
    %v1580 = vpop.trf.xlu0
    %v1581 = vpop.trf.xlu0
    %v1582 = vpop.trf.xlu0
    %v1583 = vpop.trf.xlu0
    %v1584 = vpop.trf.xlu0
    %v1585 = vpop.trf.xlu0
    %v1586 = vpop.trf.xlu0
    %v1587 = vpop.trf.xlu0
    %v1590 = vunpack.c.l.b16 %v1458
    %v1591 = vunpack.c.l.b16 %v1459
    %v1592 = vpack.c.b16 %v1591, %v1590
    %v1595 = vsel %vm1492, %v1580, 0
    %v1598 = vsel %vm1492, %v1581, 0
    %v1601 = vsel %vm1492, %v1582, 0
    %v1604 = vsel %vm1492, %v1583, 0
    %v1607 = vsel %vm1492, %v1584, 0
    %v1610 = vsel %vm1492, %v1585, 0
    %v1613 = vsel %vm1492, %v1586, 0
    %v1616 = vsel %vm1492, %v1587, 0
    %1618 = vmatpush.bf16.msra.mxu0 0
    %1619 = vmatpush.bf16.msra.mxu0 0
    %1620 = vmatpush.bf16.msra.mxu0 0
    %1621 = vmatpush.bf16.msra.mxu0 0
    %1622 = vmatpush.bf16.msra.mxu0 0
    %1623 = vmatpush.bf16.msra.mxu0 0
    %1624 = vmatpush.bf16.msra.mxu0 0
    %1625 = vmatpush.bf16.msra.mxu0 %v1592
    %1626 = vmatmul.bf16.gmra.mxu0 %v1595
    %v1627 = vpop.f32.mrf.mxu0
    %v1628 = vadd.f32 0.0, %v1627
    %v1629 = vpop.f32.mrf.mxu0
    %v1630 = vadd.f32 0.0, %v1629
    %1631 = vmatmul.bf16.gmra.mxu0 %v1598
    %v1632 = vpop.f32.mrf.mxu0
    %v1633 = vadd.f32 0.0, %v1632
    %v1634 = vpop.f32.mrf.mxu0
    %v1635 = vadd.f32 0.0, %v1634
    %1636 = vmatmul.bf16.gmra.mxu0 %v1601
    %v1637 = vpop.f32.mrf.mxu0
    %v1638 = vadd.f32 0.0, %v1637
    %v1639 = vpop.f32.mrf.mxu0
    %v1640 = vadd.f32 0.0, %v1639
    %1641 = vmatmul.bf16.gmra.mxu0 %v1604
    %v1642 = vpop.f32.mrf.mxu0
    %v1643 = vadd.f32 0.0, %v1642
    %v1644 = vpop.f32.mrf.mxu0
    %v1645 = vadd.f32 0.0, %v1644
    %1646 = vmatmul.bf16.gmra.mxu0 %v1607
    %v1647 = vpop.f32.mrf.mxu0
    %v1648 = vadd.f32 0.0, %v1647
    %v1649 = vpop.f32.mrf.mxu0
    %v1650 = vadd.f32 0.0, %v1649
    %1651 = vmatmul.bf16.gmra.mxu0 %v1610
    %v1652 = vpop.f32.mrf.mxu0
    %v1653 = vadd.f32 0.0, %v1652
    %v1654 = vpop.f32.mrf.mxu0
    %v1655 = vadd.f32 0.0, %v1654
    %1656 = vmatmul.bf16.gmra.mxu0 %v1613
    %v1657 = vpop.f32.mrf.mxu0
    %v1658 = vadd.f32 0.0, %v1657
    %v1659 = vpop.f32.mrf.mxu0
    %v1660 = vadd.f32 0.0, %v1659
    %1661 = vmatmul.bf16.gmra.mxu0 %v1616
    %v1662 = vpop.f32.mrf.mxu0
    %v1663 = vadd.f32 0.0, %v1662
    %v1664 = vpop.f32.mrf.mxu0
    %v1665 = vadd.f32 0.0, %v1664
    %1666 = vdwg.mxu0
    %v1669 = vunpack.c.l.b16 %v1452
    %v1670 = vunpack.c.l.b16 %v1453
    %v1671 = vpack.c.b16 %v1670, %v1669
    %1673 = vxpose.xlu0.c.b16.start [1/8] %v1671, 128
    %1674 = vxpose.xlu0.c.b16.cont [2/8] 0, 128
    %1675 = vxpose.xlu0.c.b16.cont [3/8] 0, 128
    %1676 = vxpose.xlu0.c.b16.cont [4/8] 0, 128
    %1677 = vxpose.xlu0.c.b16.cont [5/8] 0, 128
    %1678 = vxpose.xlu0.c.b16.cont [6/8] 0, 128
    %1679 = vxpose.xlu0.c.b16.cont [7/8] 0, 128
    %1680 = vxpose.xlu0.c.b16.end [8/8] 0, 128
    %v1681 = vpop.trf.xlu0
    %v1682 = vpop.trf.xlu0
    %v1683 = vpop.trf.xlu0
    %v1684 = vpop.trf.xlu0
    %v1685 = vpop.trf.xlu0
    %v1686 = vpop.trf.xlu0
    %v1687 = vpop.trf.xlu0
    %v1688 = vpop.trf.xlu0
    %v1691 = vunpack.c.l.b16 %v1460
    %v1692 = vunpack.c.l.b16 %v1461
    %v1693 = vpack.c.b16 %v1692, %v1691
    %v1696 = vsel %vm1492, %v1681, 0
    %v1699 = vsel %vm1492, %v1682, 0
    %v1702 = vsel %vm1492, %v1683, 0
    %v1705 = vsel %vm1492, %v1684, 0
    %v1708 = vsel %vm1492, %v1685, 0
    %v1711 = vsel %vm1492, %v1686, 0
    %v1714 = vsel %vm1492, %v1687, 0
    %v1717 = vsel %vm1492, %v1688, 0
    %1719 = vmatpush.bf16.msra.mxu0 0
    %1720 = vmatpush.bf16.msra.mxu0 0
    %1721 = vmatpush.bf16.msra.mxu0 0
    %1722 = vmatpush.bf16.msra.mxu0 0
    %1723 = vmatpush.bf16.msra.mxu0 0
    %1724 = vmatpush.bf16.msra.mxu0 0
    %1725 = vmatpush.bf16.msra.mxu0 0
    %1726 = vmatpush.bf16.msra.mxu0 %v1693
    %1727 = vmatmul.bf16.gmra.mxu0 %v1696
    %v1728 = vpop.f32.mrf.mxu0
    %v1729 = vadd.f32 0.0, %v1728
    %v1730 = vpop.f32.mrf.mxu0
    %v1731 = vadd.f32 0.0, %v1730
    %1732 = vmatmul.bf16.gmra.mxu0 %v1699
    %v1733 = vpop.f32.mrf.mxu0
    %v1734 = vadd.f32 0.0, %v1733
    %v1735 = vpop.f32.mrf.mxu0
    %v1736 = vadd.f32 0.0, %v1735
    %1737 = vmatmul.bf16.gmra.mxu0 %v1702
    %v1738 = vpop.f32.mrf.mxu0
    %v1739 = vadd.f32 0.0, %v1738
    %v1740 = vpop.f32.mrf.mxu0
    %v1741 = vadd.f32 0.0, %v1740
    %1742 = vmatmul.bf16.gmra.mxu0 %v1705
    %v1743 = vpop.f32.mrf.mxu0
    %v1744 = vadd.f32 0.0, %v1743
    %v1745 = vpop.f32.mrf.mxu0
    %v1746 = vadd.f32 0.0, %v1745
    %1747 = vmatmul.bf16.gmra.mxu0 %v1708
    %v1748 = vpop.f32.mrf.mxu0
    %v1749 = vadd.f32 0.0, %v1748
    %v1750 = vpop.f32.mrf.mxu0
    %v1751 = vadd.f32 0.0, %v1750
    %1752 = vmatmul.bf16.gmra.mxu0 %v1711
    %v1753 = vpop.f32.mrf.mxu0
    %v1754 = vadd.f32 0.0, %v1753
    %v1755 = vpop.f32.mrf.mxu0
    %v1756 = vadd.f32 0.0, %v1755
    %1757 = vmatmul.bf16.gmra.mxu0 %v1714
    %v1758 = vpop.f32.mrf.mxu0
    %v1759 = vadd.f32 0.0, %v1758
    %v1760 = vpop.f32.mrf.mxu0
    %v1761 = vadd.f32 0.0, %v1760
    %1762 = vmatmul.bf16.gmra.mxu0 %v1717
    %v1763 = vpop.f32.mrf.mxu0
    %v1764 = vadd.f32 0.0, %v1763
    %v1765 = vpop.f32.mrf.mxu0
    %v1766 = vadd.f32 0.0, %v1765
    %1767 = vdwg.mxu0
    %v1770 = vunpack.c.l.b16 %v1454
    %v1771 = vunpack.c.l.b16 %v1455
    %v1772 = vpack.c.b16 %v1771, %v1770
    %1774 = vxpose.xlu0.c.b16.start [1/8] %v1772, 128
    %1775 = vxpose.xlu0.c.b16.cont [2/8] 0, 128
    %1776 = vxpose.xlu0.c.b16.cont [3/8] 0, 128
    %1777 = vxpose.xlu0.c.b16.cont [4/8] 0, 128
    %1778 = vxpose.xlu0.c.b16.cont [5/8] 0, 128
    %1779 = vxpose.xlu0.c.b16.cont [6/8] 0, 128
    %1780 = vxpose.xlu0.c.b16.cont [7/8] 0, 128
    %1781 = vxpose.xlu0.c.b16.end [8/8] 0, 128
    %v1782 = vpop.trf.xlu0
    %v1783 = vpop.trf.xlu0
    %v1784 = vpop.trf.xlu0
    %v1785 = vpop.trf.xlu0
    %v1786 = vpop.trf.xlu0
    %v1787 = vpop.trf.xlu0
    %v1788 = vpop.trf.xlu0
    %v1789 = vpop.trf.xlu0
    %v1792 = vunpack.c.l.b16 %v1462
    %v1793 = vunpack.c.l.b16 %v1463
    %v1794 = vpack.c.b16 %v1793, %v1792
    %v1797 = vsel %vm1492, %v1782, 0
    %v1800 = vsel %vm1492, %v1783, 0
    %v1803 = vsel %vm1492, %v1784, 0
    %v1806 = vsel %vm1492, %v1785, 0
    %v1809 = vsel %vm1492, %v1786, 0
    %v1812 = vsel %vm1492, %v1787, 0
    %v1815 = vsel %vm1492, %v1788, 0
    %v1818 = vsel %vm1492, %v1789, 0
    %1820 = vmatpush.bf16.msra.mxu0 0
    %1821 = vmatpush.bf16.msra.mxu0 0
    %1822 = vmatpush.bf16.msra.mxu0 0
    %1823 = vmatpush.bf16.msra.mxu0 0
    %1824 = vmatpush.bf16.msra.mxu0 0
    %1825 = vmatpush.bf16.msra.mxu0 0
    %1826 = vmatpush.bf16.msra.mxu0 0
    %1827 = vmatpush.bf16.msra.mxu0 %v1794
    %1828 = vmatmul.bf16.gmra.mxu0 %v1797
    %v1829 = vpop.f32.mrf.mxu0
    %v1830 = vadd.f32 0.0, %v1829
    %v1831 = vpop.f32.mrf.mxu0
    %v1832 = vadd.f32 0.0, %v1831
    %1833 = vmatmul.bf16.gmra.mxu0 %v1800
    %v1834 = vpop.f32.mrf.mxu0
    %v1835 = vadd.f32 0.0, %v1834
    %v1836 = vpop.f32.mrf.mxu0
    %v1837 = vadd.f32 0.0, %v1836
    %1838 = vmatmul.bf16.gmra.mxu0 %v1803
    %v1839 = vpop.f32.mrf.mxu0
    %v1840 = vadd.f32 0.0, %v1839
    %v1841 = vpop.f32.mrf.mxu0
    %v1842 = vadd.f32 0.0, %v1841
    %1843 = vmatmul.bf16.gmra.mxu0 %v1806
    %v1844 = vpop.f32.mrf.mxu0
    %v1845 = vadd.f32 0.0, %v1844
    %v1846 = vpop.f32.mrf.mxu0
    %v1847 = vadd.f32 0.0, %v1846
    %1848 = vmatmul.bf16.gmra.mxu0 %v1809
    %v1849 = vpop.f32.mrf.mxu0
    %v1850 = vadd.f32 0.0, %v1849
    %v1851 = vpop.f32.mrf.mxu0
    %v1852 = vadd.f32 0.0, %v1851
    %1853 = vmatmul.bf16.gmra.mxu0 %v1812
    %v1854 = vpop.f32.mrf.mxu0
    %v1855 = vadd.f32 0.0, %v1854
    %v1856 = vpop.f32.mrf.mxu0
    %v1857 = vadd.f32 0.0, %v1856
    %1858 = vmatmul.bf16.gmra.mxu0 %v1815
    %v1859 = vpop.f32.mrf.mxu0
    %v1860 = vadd.f32 0.0, %v1859
    %v1861 = vpop.f32.mrf.mxu0
    %v1862 = vadd.f32 0.0, %v1861
    %1863 = vmatmul.bf16.gmra.mxu0 %v1818
    %v1864 = vpop.f32.mrf.mxu0
    %v1865 = vadd.f32 0.0, %v1864
    %v1866 = vpop.f32.mrf.mxu0
    %v1867 = vadd.f32 0.0, %v1866
    %1868 = vdwg.mxu0
    %v1869 = vadd.f32 %v1430, %v1431
    %v1870 = vrot.slane %v1869, 4
    %v1871 = vadd.f32 %v1869, %v1870
    %v1872 = vrot.slane %v1871, 2
    %v1873 = vadd.f32 %v1871, %v1872
    %v1874 = vrot.slane %v1873, 1
    %v1875 = vadd.f32 %v1873, %v1874
    %v1876 = vadd.f32 %v1432, %v1433
    %v1877 = vrot.slane %v1876, 4
    %v1878 = vadd.f32 %v1876, %v1877
    %v1879 = vrot.slane %v1878, 2
    %v1880 = vadd.f32 %v1878, %v1879
    %v1881 = vrot.slane %v1880, 1
    %v1882 = vadd.f32 %v1880, %v1881
    %v1883 = vadd.f32 %v1434, %v1435
    %v1884 = vrot.slane %v1883, 4
    %v1885 = vadd.f32 %v1883, %v1884
    %v1886 = vrot.slane %v1885, 2
    %v1887 = vadd.f32 %v1885, %v1886
    %v1888 = vrot.slane %v1887, 1
    %v1889 = vadd.f32 %v1887, %v1888
    %v1890 = vadd.f32 %v1436, %v1437
    %v1891 = vrot.slane %v1890, 4
    %v1892 = vadd.f32 %v1890, %v1891
    %v1893 = vrot.slane %v1892, 2
    %v1894 = vadd.f32 %v1892, %v1893
    %v1895 = vrot.slane %v1894, 1
    %v1896 = vadd.f32 %v1894, %v1895
    %1897 = vmatpush.msra.mxu0 %v1564
    %1898 = vmatpush.msra.mxu0 %v1562
    %1899 = vmatpush.msra.mxu0 %v1559
    %1900 = vmatpush.msra.mxu0 %v1557
    %1901 = vmatpush.msra.mxu0 %v1554
    %1902 = vmatpush.msra.mxu0 %v1552
    %1903 = vmatpush.msra.mxu0 %v1549
    %1904 = vmatpush.msra.mxu0 %v1547
    %1905 = vmatpush.msra.mxu0 %v1544
    %1906 = vmatpush.msra.mxu0 %v1542
    %1907 = vmatpush.msra.mxu0 %v1539
    %1908 = vmatpush.msra.mxu0 %v1537
    %1909 = vmatpush.msra.mxu0 %v1534
    %1910 = vmatpush.msra.mxu0 %v1532
    %1911 = vmatpush.msra.mxu0 %v1529
    %1912 = vmatpush.msra.mxu0 %v1527
    %1913 = vmatmul.f32.gmra.mxu0 %v1390
    %v1914 = vpop.f32.mrf.mxu0
    %v1915 = vadd.f32 0.0, %v1914
    %1916 = vmatmul.f32.gmra.mxu0 %v1391
    %v1917 = vpop.f32.mrf.mxu0
    %v1918 = vadd.f32 0.0, %v1917
    %1919 = vdwg.mxu0
    %1920 = vmatpush.msra.mxu0 %v1665
    %1921 = vmatpush.msra.mxu0 %v1663
    %1922 = vmatpush.msra.mxu0 %v1660
    %1923 = vmatpush.msra.mxu0 %v1658
    %1924 = vmatpush.msra.mxu0 %v1655
    %1925 = vmatpush.msra.mxu0 %v1653
    %1926 = vmatpush.msra.mxu0 %v1650
    %1927 = vmatpush.msra.mxu0 %v1648
    %1928 = vmatpush.msra.mxu0 %v1645
    %1929 = vmatpush.msra.mxu0 %v1643
    %1930 = vmatpush.msra.mxu0 %v1640
    %1931 = vmatpush.msra.mxu0 %v1638
    %1932 = vmatpush.msra.mxu0 %v1635
    %1933 = vmatpush.msra.mxu0 %v1633
    %1934 = vmatpush.msra.mxu0 %v1630
    %1935 = vmatpush.msra.mxu0 %v1628
    %1936 = vmatmul.f32.gmra.mxu0 %v1392
    %v1937 = vpop.f32.mrf.mxu0
    %v1938 = vadd.f32 0.0, %v1937
    %1939 = vmatmul.f32.gmra.mxu0 %v1393
    %v1940 = vpop.f32.mrf.mxu0
    %v1941 = vadd.f32 0.0, %v1940
    %1942 = vdwg.mxu0
    %1943 = vmatpush.msra.mxu0 %v1766
    %1944 = vmatpush.msra.mxu0 %v1764
    %1945 = vmatpush.msra.mxu0 %v1761
    %1946 = vmatpush.msra.mxu0 %v1759
    %1947 = vmatpush.msra.mxu0 %v1756
    %1948 = vmatpush.msra.mxu0 %v1754
    %1949 = vmatpush.msra.mxu0 %v1751
    %1950 = vmatpush.msra.mxu0 %v1749
    %1951 = vmatpush.msra.mxu0 %v1746
    %1952 = vmatpush.msra.mxu0 %v1744
    %1953 = vmatpush.msra.mxu0 %v1741
    %1954 = vmatpush.msra.mxu0 %v1739
    %1955 = vmatpush.msra.mxu0 %v1736
    %1956 = vmatpush.msra.mxu0 %v1734
    %1957 = vmatpush.msra.mxu0 %v1731
    %1958 = vmatpush.msra.mxu0 %v1729
    %1959 = vmatmul.f32.gmra.mxu0 %v1394
    %v1960 = vpop.f32.mrf.mxu0
    %v1961 = vadd.f32 0.0, %v1960
    %1962 = vmatmul.f32.gmra.mxu0 %v1395
    %v1963 = vpop.f32.mrf.mxu0
    %v1964 = vadd.f32 0.0, %v1963
    %1965 = vdwg.mxu0
    %1966 = vmatpush.msra.mxu0 %v1867
    %1967 = vmatpush.msra.mxu0 %v1865
    %1968 = vmatpush.msra.mxu0 %v1862
    %1969 = vmatpush.msra.mxu0 %v1860
    %1970 = vmatpush.msra.mxu0 %v1857
    %1971 = vmatpush.msra.mxu0 %v1855
    %1972 = vmatpush.msra.mxu0 %v1852
    %1973 = vmatpush.msra.mxu0 %v1850
    %1974 = vmatpush.msra.mxu0 %v1847
    %1975 = vmatpush.msra.mxu0 %v1845
    %1976 = vmatpush.msra.mxu0 %v1842
    %1977 = vmatpush.msra.mxu0 %v1840
    %1978 = vmatpush.msra.mxu0 %v1837
    %1979 = vmatpush.msra.mxu0 %v1835
    %1980 = vmatpush.msra.mxu0 %v1832
    %1981 = vmatpush.msra.mxu0 %v1830
    %1982 = vmatmul.f32.gmra.mxu0 %v1396
    %v1983 = vpop.f32.mrf.mxu0
    %v1984 = vadd.f32 0.0, %v1983
    %1985 = vmatmul.f32.gmra.mxu0 %v1397
    %v1986 = vpop.f32.mrf.mxu0
    %v1987 = vadd.f32 0.0, %v1986
    %1988 = vdwg.mxu0
    %v1989 = vmul.f32 %v1390, %v1875
    %v1990 = vmul.f32 %v1391, %v1875
    %v1991 = vmul.f32 %v1392, %v1882
    %v1992 = vmul.f32 %v1393, %v1882
    %v1993 = vmul.f32 %v1394, %v1889
    %v1994 = vmul.f32 %v1395, %v1889
    %v1995 = vmul.f32 %v1396, %v1896
    %v1996 = vmul.f32 %v1397, %v1896
    %1997 = vadd.xlane.f32.xlu0 %v1989
    %v1998 = vpop.xlane.xlu0 %1997
    %1999 = vadd.xlane.f32.xlu0 %v1990
    %v2000 = vpop.xlane.xlu0 %1999
    %2001 = vadd.xlane.f32.xlu0 %v1991
    %v2002 = vpop.xlane.xlu0 %2001
    %2003 = vadd.xlane.f32.xlu0 %v1992
    %v2004 = vpop.xlane.xlu0 %2003
    %2005 = vadd.xlane.f32.xlu0 %v1993
    %v2006 = vpop.xlane.xlu0 %2005
    %2007 = vadd.xlane.f32.xlu0 %v1994
    %v2008 = vpop.xlane.xlu0 %2007
    %2009 = vadd.xlane.f32.xlu0 %v1995
    %v2010 = vpop.xlane.xlu0 %2009
    %2011 = vadd.xlane.f32.xlu0 %v1996
    %v2012 = vpop.xlane.xlu0 %2011
    %v2013 = vadd.f32 %v1998, 1e-06
    %v2014 = vadd.f32 %v2000, 1e-06
    %v2015 = vadd.f32 %v2002, 1e-06
    %v2016 = vadd.f32 %v2004, 1e-06
    %v2017 = vadd.f32 %v2006, 1e-06
    %v2018 = vadd.f32 %v2008, 1e-06
    %v2019 = vadd.f32 %v2010, 1e-06
    %v2020 = vadd.f32 %v2012, 1e-06
    %v2021 = vrcp.pop %v2013
    %v2022 = vrcp.pop %v2014
    %v2023 = vrcp.pop %v2015
    %v2024 = vrcp.pop %v2016
    %v2025 = vrcp.pop %v2017
    %v2026 = vrcp.pop %v2018
    %v2027 = vrcp.pop %v2019
    %v2028 = vrcp.pop %v2020
    %v2029 = vmul.f32 %v1915, %v2021
    %v2030 = vmul.f32 %v1918, %v2022
    %v2031 = vmul.f32 %v1938, %v2023
    %v2032 = vmul.f32 %v1941, %v2024
    %v2033 = vmul.f32 %v1961, %v2025
    %v2034 = vmul.f32 %v1964, %v2026
    %v2035 = vmul.f32 %v1984, %v2027
    %v2036 = vmul.f32 %v1987, %v2028
    %v2037 = vadd.f32 %v1330, %v2029
    %v2038 = vadd.f32 %v1331, %v2030
    %v2039 = vadd.f32 %v1332, %v2031
    %v2040 = vadd.f32 %v1333, %v2032
    %v2041 = vadd.f32 %v1334, %v2033
    %v2042 = vadd.f32 %v1335, %v2034
    %v2043 = vadd.f32 %v1336, %v2035
    %v2044 = vadd.f32 %v1337, %v2036
    %v2045 = vld [vmem:[#allocation5 + $0x15] sm:$0x1]
    %v2046 = vld [vmem:[#allocation5 + $0x16] sm:$0x1]
    %2047 = vadd.xlane.f32.xlu0 %v2037
    %v2048 = vpop.xlane.xlu0 %2047
    %2049 = vadd.xlane.f32.xlu0 %v2038
    %v2050 = vpop.xlane.xlu0 %2049
    %2051 = vadd.xlane.f32.xlu0 %v2039
    %v2052 = vpop.xlane.xlu0 %2051
    %2053 = vadd.xlane.f32.xlu0 %v2040
    %v2054 = vpop.xlane.xlu0 %2053
    %2055 = vadd.xlane.f32.xlu0 %v2041
    %v2056 = vpop.xlane.xlu0 %2055
    %2057 = vadd.xlane.f32.xlu0 %v2042
    %v2058 = vpop.xlane.xlu0 %2057
    %2059 = vadd.xlane.f32.xlu0 %v2043
    %v2060 = vpop.xlane.xlu0 %2059
    %2061 = vadd.xlane.f32.xlu0 %v2044
    %v2062 = vpop.xlane.xlu0 %2061
    %v2063 = vmul.f32 %v2048, %v378
    %v2064 = vmul.f32 %v2050, %v378
    %v2065 = vmul.f32 %v2052, %v378
    %v2066 = vmul.f32 %v2054, %v378
    %v2067 = vmul.f32 %v2056, %v378
    %v2068 = vmul.f32 %v2058, %v378
    %v2069 = vmul.f32 %v2060, %v378
    %v2070 = vmul.f32 %v2062, %v378
    %v2071 = vsub.f32 %v2037, %v2063
    %v2072 = vsub.f32 %v2038, %v2064
    %v2073 = vsub.f32 %v2039, %v2065
    %v2074 = vsub.f32 %v2040, %v2066
    %v2075 = vsub.f32 %v2041, %v2067
    %v2076 = vsub.f32 %v2042, %v2068
    %v2077 = vsub.f32 %v2043, %v2069
    %v2078 = vsub.f32 %v2044, %v2070
    %v2079 = vmul.f32 %v2071, %v2071
    %v2080 = vmul.f32 %v2072, %v2072
    %v2081 = vmul.f32 %v2073, %v2073
    %v2082 = vmul.f32 %v2074, %v2074
    %v2083 = vmul.f32 %v2075, %v2075
    %v2084 = vmul.f32 %v2076, %v2076
    %v2085 = vmul.f32 %v2077, %v2077
    %v2086 = vmul.f32 %v2078, %v2078
    %2087 = vadd.xlane.f32.xlu0 %v2079
    %v2088 = vpop.xlane.xlu0 %2087
    %2089 = vadd.xlane.f32.xlu0 %v2080
    %v2090 = vpop.xlane.xlu0 %2089
    %2091 = vadd.xlane.f32.xlu0 %v2081
    %v2092 = vpop.xlane.xlu0 %2091
    %2093 = vadd.xlane.f32.xlu0 %v2082
    %v2094 = vpop.xlane.xlu0 %2093
    %2095 = vadd.xlane.f32.xlu0 %v2083
    %v2096 = vpop.xlane.xlu0 %2095
    %2097 = vadd.xlane.f32.xlu0 %v2084
    %v2098 = vpop.xlane.xlu0 %2097
    %2099 = vadd.xlane.f32.xlu0 %v2085
    %v2100 = vpop.xlane.xlu0 %2099
    %2101 = vadd.xlane.f32.xlu0 %v2086
    %v2102 = vpop.xlane.xlu0 %2101
    %v2103 = vmul.f32 %v2088, %v378
    %v2104 = vmul.f32 %v2090, %v378
    %v2105 = vmul.f32 %v2092, %v378
    %v2106 = vmul.f32 %v2094, %v378
    %v2107 = vmul.f32 %v2096, %v378
    %v2108 = vmul.f32 %v2098, %v378
    %v2109 = vmul.f32 %v2100, %v378
    %v2110 = vmul.f32 %v2102, %v378
    %v2111 = vadd.f32 %v2103, 1e-05
    %v2112 = vadd.f32 %v2104, 1e-05
    %v2113 = vadd.f32 %v2105, 1e-05
    %v2114 = vadd.f32 %v2106, 1e-05
    %v2115 = vadd.f32 %v2107, 1e-05
    %v2116 = vadd.f32 %v2108, 1e-05
    %v2117 = vadd.f32 %v2109, 1e-05
    %v2118 = vadd.f32 %v2110, 1e-05
    %v2119 = vrsqrt.pop %v2111
    %v2120 = vmul.f32 %v2119, %v2111
    %v2121 = vmul.f32 %v2120, %v2119
    %v2122 = vmul.f32 0.5, %v2121
    %v2123 = vsub.f32 1.5, %v2122
    %v2124 = vmul.f32 %v2119, %v2123
    %vm2125 = vweird.f32 %v2111
    %vm2126 = vweird.f32 %v2119
    %vm2127 = vmor %vm2125, %vm2126
    %v2128 = vsel %vm2127, %v2119, %v2124
    %v2129 = vrsqrt.pop %v2112
    %v2130 = vmul.f32 %v2129, %v2112
    %v2131 = vmul.f32 %v2130, %v2129
    %v2132 = vmul.f32 0.5, %v2131
    %v2133 = vsub.f32 1.5, %v2132
    %v2134 = vmul.f32 %v2129, %v2133
    %vm2135 = vweird.f32 %v2112
    %vm2136 = vweird.f32 %v2129
    %vm2137 = vmor %vm2135, %vm2136
    %v2138 = vsel %vm2137, %v2129, %v2134
    %v2139 = vrsqrt.pop %v2113
    %v2140 = vmul.f32 %v2139, %v2113
    %v2141 = vmul.f32 %v2140, %v2139
    %v2142 = vmul.f32 0.5, %v2141
    %v2143 = vsub.f32 1.5, %v2142
    %v2144 = vmul.f32 %v2139, %v2143
    %vm2145 = vweird.f32 %v2113
    %vm2146 = vweird.f32 %v2139
    %vm2147 = vmor %vm2145, %vm2146
    %v2148 = vsel %vm2147, %v2139, %v2144
    %v2149 = vrsqrt.pop %v2114
    %v2150 = vmul.f32 %v2149, %v2114
    %v2151 = vmul.f32 %v2150, %v2149
    %v2152 = vmul.f32 0.5, %v2151
    %v2153 = vsub.f32 1.5, %v2152
    %v2154 = vmul.f32 %v2149, %v2153
    %vm2155 = vweird.f32 %v2114
    %vm2156 = vweird.f32 %v2149
    %vm2157 = vmor %vm2155, %vm2156
    %v2158 = vsel %vm2157, %v2149, %v2154
    %v2159 = vrsqrt.pop %v2115
    %v2160 = vmul.f32 %v2159, %v2115
    %v2161 = vmul.f32 %v2160, %v2159
    %v2162 = vmul.f32 0.5, %v2161
    %v2163 = vsub.f32 1.5, %v2162
    %v2164 = vmul.f32 %v2159, %v2163
    %vm2165 = vweird.f32 %v2115
    %vm2166 = vweird.f32 %v2159
    %vm2167 = vmor %vm2165, %vm2166
    %v2168 = vsel %vm2167, %v2159, %v2164
    %v2169 = vrsqrt.pop %v2116
    %v2170 = vmul.f32 %v2169, %v2116
    %v2171 = vmul.f32 %v2170, %v2169
    %v2172 = vmul.f32 0.5, %v2171
    %v2173 = vsub.f32 1.5, %v2172
    %v2174 = vmul.f32 %v2169, %v2173
    %vm2175 = vweird.f32 %v2116
    %vm2176 = vweird.f32 %v2169
    %vm2177 = vmor %vm2175, %vm2176
    %v2178 = vsel %vm2177, %v2169, %v2174
    %v2179 = vrsqrt.pop %v2117
    %v2180 = vmul.f32 %v2179, %v2117
    %v2181 = vmul.f32 %v2180, %v2179
    %v2182 = vmul.f32 0.5, %v2181
    %v2183 = vsub.f32 1.5, %v2182
    %v2184 = vmul.f32 %v2179, %v2183
    %vm2185 = vweird.f32 %v2117
    %vm2186 = vweird.f32 %v2179
    %vm2187 = vmor %vm2185, %vm2186
    %v2188 = vsel %vm2187, %v2179, %v2184
    %v2189 = vrsqrt.pop %v2118
    %v2190 = vmul.f32 %v2189, %v2118
    %v2191 = vmul.f32 %v2190, %v2189
    %v2192 = vmul.f32 0.5, %v2191
    %v2193 = vsub.f32 1.5, %v2192
    %v2194 = vmul.f32 %v2189, %v2193
    %vm2195 = vweird.f32 %v2118
    %vm2196 = vweird.f32 %v2189
    %vm2197 = vmor %vm2195, %vm2196
    %v2198 = vsel %vm2197, %v2189, %v2194
    %v2199 = vmul.f32 %v2071, %v2128
    %v2200 = vmul.f32 %v2072, %v2138
    %v2201 = vmul.f32 %v2073, %v2148
    %v2202 = vmul.f32 %v2074, %v2158
    %v2203 = vmul.f32 %v2075, %v2168
    %v2204 = vmul.f32 %v2076, %v2178
    %v2205 = vmul.f32 %v2077, %v2188
    %v2206 = vmul.f32 %v2078, %v2198
    %v2207 = vperm.slane %v2045, 0
    %v2208 = vmul.f32 %v2199, %v2207
    %v2209 = vmul.f32 %v2200, %v2207
    %v2210 = vmul.f32 %v2201, %v2207
    %v2211 = vmul.f32 %v2202, %v2207
    %v2212 = vmul.f32 %v2203, %v2207
    %v2213 = vmul.f32 %v2204, %v2207
    %v2214 = vmul.f32 %v2205, %v2207
    %v2215 = vmul.f32 %v2206, %v2207
    %v2216 = vperm.slane %v2046, 0
    %v2217 = vadd.f32 %v2208, %v2216
    %v2218 = vadd.f32 %v2209, %v2216
    %v2219 = vadd.f32 %v2210, %v2216
    %v2220 = vadd.f32 %v2211, %v2216
    %v2221 = vadd.f32 %v2212, %v2216
    %v2222 = vadd.f32 %v2213, %v2216
    %v2223 = vadd.f32 %v2214, %v2216
    %v2224 = vadd.f32 %v2215, %v2216
    %v2225 = vpack.c.bf16 %v2218, %v2217
    %v2226 = vpack.c.bf16 %v2220, %v2219
    %v2227 = vpack.c.bf16 %v2222, %v2221
    %v2228 = vpack.c.bf16 %v2224, %v2223
    %v2229 = vld [vmem:[#allocation10] sm:$0xf]
    %v2230 = vld [vmem:[#allocation10 + $0x4] sm:$0xf]
    %v2231 = vld [vmem:[#allocation10 + $0x8] sm:$0xf]
    %v2232 = vld [vmem:[#allocation10 + $0xc] sm:$0xf]
    %v2233 = vld [vmem:[#allocation10 + $0x10] sm:$0xf]
    %v2234 = vld [vmem:[#allocation10 + $0x14] sm:$0xf]
    %v2235 = vld [vmem:[#allocation10 + $0x18] sm:$0xf]
    %v2236 = vld [vmem:[#allocation10 + $0x1c] sm:$0xf]
    %v2237 = vld [vmem:[#allocation10 + $0x20] sm:$0xf]
    %v2238 = vld [vmem:[#allocation10 + $0x24] sm:$0xf]
    %v2239 = vld [vmem:[#allocation10 + $0x28] sm:$0xf]
    %v2240 = vld [vmem:[#allocation10 + $0x2c] sm:$0xf]
    %v2241 = vld [vmem:[#allocation10 + $0x30] sm:$0xf]
    %v2242 = vld [vmem:[#allocation10 + $0x34] sm:$0xf]
    %v2243 = vld [vmem:[#allocation10 + $0x38] sm:$0xf]
    %v2244 = vld [vmem:[#allocation10 + $0x3c] sm:$0xf]
    %v2245 = vld [vmem:[#allocation5 + $0x13] sm:$0x1]
    %v2246 = vperm.slane %v2245, 0
    %v2263 = vunpack.c.l.b16 %v2229
    %v2264 = vunpack.c.l.b16 %v2230
    %v2265 = vunpack.c.l.b16 %v2231
    %v2266 = vunpack.c.l.b16 %v2232
    %v2267 = vunpack.c.l.b16 %v2233
    %v2268 = vunpack.c.l.b16 %v2234
    %v2269 = vunpack.c.l.b16 %v2235
    %v2270 = vunpack.c.l.b16 %v2236
    %v2271 = vunpack.c.l.b16 %v2237
    %v2272 = vunpack.c.l.b16 %v2238
    %v2273 = vunpack.c.l.b16 %v2239
    %v2274 = vunpack.c.l.b16 %v2240
    %v2275 = vunpack.c.l.b16 %v2241
    %v2276 = vunpack.c.l.b16 %v2242
    %v2277 = vunpack.c.l.b16 %v2243
    %v2278 = vunpack.c.l.b16 %v2244
    %v2279 = vpack.c.b16 %v2264, %v2263
    %v2280 = vpack.c.b16 %v2266, %v2265
    %v2281 = vpack.c.b16 %v2268, %v2267
    %v2282 = vpack.c.b16 %v2270, %v2269
    %v2283 = vpack.c.b16 %v2272, %v2271
    %v2284 = vpack.c.b16 %v2274, %v2273
    %v2285 = vpack.c.b16 %v2276, %v2275
    %v2286 = vpack.c.b16 %v2278, %v2277
    %2295 = vmatpush.bf16.msra.mxu0 %v2286
    %2296 = vmatpush.bf16.msra.mxu0 %v2285
    %2297 = vmatpush.bf16.msra.mxu0 %v2284
    %2298 = vmatpush.bf16.msra.mxu0 %v2283
    %2299 = vmatpush.bf16.msra.mxu0 %v2282
    %2300 = vmatpush.bf16.msra.mxu0 %v2281
    %2301 = vmatpush.bf16.msra.mxu0 %v2280
    %2302 = vmatpush.bf16.msra.mxu0 %v2279
    %2303 = vmatmul.bf16.gmra.mxu0 %v2225
    %v2304 = vpop.f32.mrf.mxu0
    %v2305 = vadd.f32 %v2246, %v2304
    %v2306 = vpop.f32.mrf.mxu0
    %v2307 = vadd.f32 %v2246, %v2306
    %2308 = vmatmul.bf16.gmra.mxu0 %v2226
    %v2309 = vpop.f32.mrf.mxu0
    %v2310 = vadd.f32 %v2246, %v2309
    %v2311 = vpop.f32.mrf.mxu0
    %v2312 = vadd.f32 %v2246, %v2311
    %2313 = vmatmul.bf16.gmra.mxu0 %v2227
    %v2314 = vpop.f32.mrf.mxu0
    %v2315 = vadd.f32 %v2246, %v2314
    %v2316 = vpop.f32.mrf.mxu0
    %v2317 = vadd.f32 %v2246, %v2316
    %2318 = vmatmul.bf16.gmra.mxu0 %v2228
    %v2319 = vpop.f32.mrf.mxu0
    %v2320 = vadd.f32 %v2246, %v2319
    %v2321 = vpop.f32.mrf.mxu0
    %v2322 = vadd.f32 %v2246, %v2321
    %2323 = vdwg.mxu0
    %v2324 = vmul.f32 %v2305, 0.5
    %v2325 = vmul.f32 %v2307, 0.5
    %v2326 = vmul.f32 %v2310, 0.5
    %v2327 = vmul.f32 %v2312, 0.5
    %v2328 = vmul.f32 %v2315, 0.5
    %v2329 = vmul.f32 %v2317, 0.5
    %v2330 = vmul.f32 %v2320, 0.5
    %v2331 = vmul.f32 %v2322, 0.5
    %v2332 = vmul.f32 %v2305, 0.044715
    %v2333 = vmul.f32 %v2307, 0.044715
    %v2334 = vmul.f32 %v2310, 0.044715
    %v2335 = vmul.f32 %v2312, 0.044715
    %v2336 = vmul.f32 %v2315, 0.044715
    %v2337 = vmul.f32 %v2317, 0.044715
    %v2338 = vmul.f32 %v2320, 0.044715
    %v2339 = vmul.f32 %v2322, 0.044715
    %v2340 = vmul.f32 %v2332, %v2305
    %v2341 = vmul.f32 %v2333, %v2307
    %v2342 = vmul.f32 %v2334, %v2310
    %v2343 = vmul.f32 %v2335, %v2312
    %v2344 = vmul.f32 %v2336, %v2315
    %v2345 = vmul.f32 %v2337, %v2317
    %v2346 = vmul.f32 %v2338, %v2320
    %v2347 = vmul.f32 %v2339, %v2322
    %v2348 = vmul.f32 %v2340, %v2305
    %v2349 = vmul.f32 %v2341, %v2307
    %v2350 = vmul.f32 %v2342, %v2310
    %v2351 = vmul.f32 %v2343, %v2312
    %v2352 = vmul.f32 %v2344, %v2315
    %v2353 = vmul.f32 %v2345, %v2317
    %v2354 = vmul.f32 %v2346, %v2320
    %v2355 = vmul.f32 %v2347, %v2322
    %v2356 = vadd.f32 %v2305, %v2348
    %v2357 = vadd.f32 %v2307, %v2349
    %v2358 = vadd.f32 %v2310, %v2350
    %v2359 = vadd.f32 %v2312, %v2351
    %v2360 = vadd.f32 %v2315, %v2352
    %v2361 = vadd.f32 %v2317, %v2353
    %v2362 = vadd.f32 %v2320, %v2354
    %v2363 = vadd.f32 %v2322, %v2355
    %v2364 = vmul.f32 %v2356, 0.7978846
    %v2365 = vmul.f32 %v2357, 0.7978846
    %v2366 = vmul.f32 %v2358, 0.7978846
    %v2367 = vmul.f32 %v2359, 0.7978846
    %v2368 = vmul.f32 %v2360, 0.7978846
    %v2369 = vmul.f32 %v2361, 0.7978846
    %v2370 = vmul.f32 %v2362, 0.7978846
    %v2371 = vmul.f32 %v2363, 0.7978846
    %v2372 = vtanh.pop %v2364
    %v2373 = vtanh.pop %v2365
    %v2374 = vtanh.pop %v2366
    %v2375 = vtanh.pop %v2367
    %v2376 = vtanh.pop %v2368
    %v2377 = vtanh.pop %v2369
    %v2378 = vtanh.pop %v2370
    %v2379 = vtanh.pop %v2371
    %v2380 = vadd.f32 %v2372, 1.0
    %v2381 = vadd.f32 %v2373, 1.0
    %v2382 = vadd.f32 %v2374, 1.0
    %v2383 = vadd.f32 %v2375, 1.0
    %v2384 = vadd.f32 %v2376, 1.0
    %v2385 = vadd.f32 %v2377, 1.0
    %v2386 = vadd.f32 %v2378, 1.0
    %v2387 = vadd.f32 %v2379, 1.0
    %v2388 = vmul.f32 %v2324, %v2380
    %v2389 = vmul.f32 %v2325, %v2381
    %v2390 = vmul.f32 %v2326, %v2382
    %v2391 = vmul.f32 %v2327, %v2383
    %v2392 = vmul.f32 %v2328, %v2384
    %v2393 = vmul.f32 %v2329, %v2385
    %v2394 = vmul.f32 %v2330, %v2386
    %v2395 = vmul.f32 %v2331, %v2387
    %v2396 = vpack.c.bf16 %v2389, %v2388
    %v2397 = vpack.c.bf16 %v2391, %v2390
    %v2398 = vpack.c.bf16 %v2393, %v2392
    %v2399 = vpack.c.bf16 %v2395, %v2394
    %v2400 = vld [vmem:[#allocation11] sm:$0xf]
    %v2401 = vld [vmem:[#allocation11 + $0x4] sm:$0xf]
    %v2402 = vld [vmem:[#allocation11 + $0x8] sm:$0xf]
    %v2403 = vld [vmem:[#allocation11 + $0xc] sm:$0xf]
    %v2404 = vld [vmem:[#allocation11 + $0x10] sm:$0xf]
    %v2405 = vld [vmem:[#allocation11 + $0x14] sm:$0xf]
    %v2406 = vld [vmem:[#allocation11 + $0x18] sm:$0xf]
    %v2407 = vld [vmem:[#allocation11 + $0x1c] sm:$0xf]
    %v2408 = vld [vmem:[#allocation11 + $0x20] sm:$0xf]
    %v2409 = vld [vmem:[#allocation11 + $0x24] sm:$0xf]
    %v2410 = vld [vmem:[#allocation11 + $0x28] sm:$0xf]
    %v2411 = vld [vmem:[#allocation11 + $0x2c] sm:$0xf]
    %v2412 = vld [vmem:[#allocation11 + $0x30] sm:$0xf]
    %v2413 = vld [vmem:[#allocation11 + $0x34] sm:$0xf]
    %v2414 = vld [vmem:[#allocation11 + $0x38] sm:$0xf]
    %v2415 = vld [vmem:[#allocation11 + $0x3c] sm:$0xf]
    %v2432 = vunpack.c.l.b16 %v2400
    %v2433 = vunpack.c.l.b16 %v2401
    %v2434 = vunpack.c.l.b16 %v2402
    %v2435 = vunpack.c.l.b16 %v2403
    %v2436 = vunpack.c.l.b16 %v2404
    %v2437 = vunpack.c.l.b16 %v2405
    %v2438 = vunpack.c.l.b16 %v2406
    %v2439 = vunpack.c.l.b16 %v2407
    %v2440 = vunpack.c.l.b16 %v2408
    %v2441 = vunpack.c.l.b16 %v2409
    %v2442 = vunpack.c.l.b16 %v2410
    %v2443 = vunpack.c.l.b16 %v2411
    %v2444 = vunpack.c.l.b16 %v2412
    %v2445 = vunpack.c.l.b16 %v2413
    %v2446 = vunpack.c.l.b16 %v2414
    %v2447 = vunpack.c.l.b16 %v2415
    %v2448 = vpack.c.b16 %v2433, %v2432
    %v2449 = vpack.c.b16 %v2435, %v2434
    %v2450 = vpack.c.b16 %v2437, %v2436
    %v2451 = vpack.c.b16 %v2439, %v2438
    %v2452 = vpack.c.b16 %v2441, %v2440
    %v2453 = vpack.c.b16 %v2443, %v2442
    %v2454 = vpack.c.b16 %v2445, %v2444
    %v2455 = vpack.c.b16 %v2447, %v2446
    %2464 = vmatpush.bf16.msra.mxu0 %v2455
    %2465 = vmatpush.bf16.msra.mxu0 %v2454
    %2466 = vmatpush.bf16.msra.mxu0 %v2453
    %2467 = vmatpush.bf16.msra.mxu0 %v2452
    %2468 = vmatpush.bf16.msra.mxu0 %v2451
    %2469 = vmatpush.bf16.msra.mxu0 %v2450
    %2470 = vmatpush.bf16.msra.mxu0 %v2449
    %2471 = vmatpush.bf16.msra.mxu0 %v2448
    %2472 = vmatmul.bf16.gmra.mxu0 %v2396
    %v2473 = vpop.f32.mrf.mxu0
    %v2474 = vadd.f32 0.0, %v2473
    %v2475 = vpop.f32.mrf.mxu0
    %v2476 = vadd.f32 0.0, %v2475
    %2477 = vmatmul.bf16.gmra.mxu0 %v2397
    %v2478 = vpop.f32.mrf.mxu0
    %v2479 = vadd.f32 0.0, %v2478
    %v2480 = vpop.f32.mrf.mxu0
    %v2481 = vadd.f32 0.0, %v2480
    %2482 = vmatmul.bf16.gmra.mxu0 %v2398
    %v2483 = vpop.f32.mrf.mxu0
    %v2484 = vadd.f32 0.0, %v2483
    %v2485 = vpop.f32.mrf.mxu0
    %v2486 = vadd.f32 0.0, %v2485
    %2487 = vmatmul.bf16.gmra.mxu0 %v2399
    %v2488 = vpop.f32.mrf.mxu0
    %v2489 = vadd.f32 0.0, %v2488
    %v2490 = vpop.f32.mrf.mxu0
    %v2491 = vadd.f32 0.0, %v2490
    %2492 = vdwg.mxu0
    %v2493 = vadd.f32 %v2217, %v2474
    %v2494 = vadd.f32 %v2218, %v2476
    %v2495 = vadd.f32 %v2219, %v2479
    %v2496 = vadd.f32 %v2220, %v2481
    %v2497 = vadd.f32 %v2221, %v2484
    %v2498 = vadd.f32 %v2222, %v2486
    %v2499 = vadd.f32 %v2223, %v2489
    %v2500 = vadd.f32 %v2224, %v2491
    %v2501 = vld [vmem:[#allocation5 + $0x14] sm:$0x1]
    %v2502 = vperm.slane %v2501, 0
    %v2503 = vadd.f32 %v2493, %v2502
    %v2504 = vadd.f32 %v2494, %v2502
    %v2505 = vadd.f32 %v2495, %v2502
    %v2506 = vadd.f32 %v2496, %v2502
    %v2507 = vadd.f32 %v2497, %v2502
    %v2508 = vadd.f32 %v2498, %v2502
    %v2509 = vadd.f32 %v2499, %v2502
    %v2510 = vadd.f32 %v2500, %v2502
    %v2511 = vld [vmem:[#allocation5 + $0x17] sm:$0x1]
    %v2512 = vld [vmem:[#allocation5 + $0x18] sm:$0x1]
    %2513 = vadd.xlane.f32.xlu0 %v2503
    %v2514 = vpop.xlane.xlu0 %2513
    %2515 = vadd.xlane.f32.xlu0 %v2504
    %v2516 = vpop.xlane.xlu0 %2515
    %2517 = vadd.xlane.f32.xlu0 %v2505
    %v2518 = vpop.xlane.xlu0 %2517
    %2519 = vadd.xlane.f32.xlu0 %v2506
    %v2520 = vpop.xlane.xlu0 %2519
    %2521 = vadd.xlane.f32.xlu0 %v2507
    %v2522 = vpop.xlane.xlu0 %2521
    %2523 = vadd.xlane.f32.xlu0 %v2508
    %v2524 = vpop.xlane.xlu0 %2523
    %2525 = vadd.xlane.f32.xlu0 %v2509
    %v2526 = vpop.xlane.xlu0 %2525
    %2527 = vadd.xlane.f32.xlu0 %v2510
    %v2528 = vpop.xlane.xlu0 %2527
    %v2529 = vmul.f32 %v2514, %v378
    %v2530 = vmul.f32 %v2516, %v378
    %v2531 = vmul.f32 %v2518, %v378
    %v2532 = vmul.f32 %v2520, %v378
    %v2533 = vmul.f32 %v2522, %v378
    %v2534 = vmul.f32 %v2524, %v378
    %v2535 = vmul.f32 %v2526, %v378
    %v2536 = vmul.f32 %v2528, %v378
    %v2537 = vsub.f32 %v2503, %v2529
    %v2538 = vsub.f32 %v2504, %v2530
    %v2539 = vsub.f32 %v2505, %v2531
    %v2540 = vsub.f32 %v2506, %v2532
    %v2541 = vsub.f32 %v2507, %v2533
    %v2542 = vsub.f32 %v2508, %v2534
    %v2543 = vsub.f32 %v2509, %v2535
    %v2544 = vsub.f32 %v2510, %v2536
    %v2545 = vmul.f32 %v2537, %v2537
    %v2546 = vmul.f32 %v2538, %v2538
    %v2547 = vmul.f32 %v2539, %v2539
    %v2548 = vmul.f32 %v2540, %v2540
    %v2549 = vmul.f32 %v2541, %v2541
    %v2550 = vmul.f32 %v2542, %v2542
    %v2551 = vmul.f32 %v2543, %v2543
    %v2552 = vmul.f32 %v2544, %v2544
    %2553 = vadd.xlane.f32.xlu0 %v2545
    %v2554 = vpop.xlane.xlu0 %2553
    %2555 = vadd.xlane.f32.xlu0 %v2546
    %v2556 = vpop.xlane.xlu0 %2555
    %2557 = vadd.xlane.f32.xlu0 %v2547
    %v2558 = vpop.xlane.xlu0 %2557
    %2559 = vadd.xlane.f32.xlu0 %v2548
    %v2560 = vpop.xlane.xlu0 %2559
    %2561 = vadd.xlane.f32.xlu0 %v2549
    %v2562 = vpop.xlane.xlu0 %2561
    %2563 = vadd.xlane.f32.xlu0 %v2550
    %v2564 = vpop.xlane.xlu0 %2563
    %2565 = vadd.xlane.f32.xlu0 %v2551
    %v2566 = vpop.xlane.xlu0 %2565
    %2567 = vadd.xlane.f32.xlu0 %v2552
    %v2568 = vpop.xlane.xlu0 %2567
    %v2569 = vmul.f32 %v2554, %v378
    %v2570 = vmul.f32 %v2556, %v378
    %v2571 = vmul.f32 %v2558, %v378
    %v2572 = vmul.f32 %v2560, %v378
    %v2573 = vmul.f32 %v2562, %v378
    %v2574 = vmul.f32 %v2564, %v378
    %v2575 = vmul.f32 %v2566, %v378
    %v2576 = vmul.f32 %v2568, %v378
    %v2577 = vadd.f32 %v2569, 1e-05
    %v2578 = vadd.f32 %v2570, 1e-05
    %v2579 = vadd.f32 %v2571, 1e-05
    %v2580 = vadd.f32 %v2572, 1e-05
    %v2581 = vadd.f32 %v2573, 1e-05
    %v2582 = vadd.f32 %v2574, 1e-05
    %v2583 = vadd.f32 %v2575, 1e-05
    %v2584 = vadd.f32 %v2576, 1e-05
    %v2585 = vrsqrt.pop %v2577
    %v2586 = vmul.f32 %v2585, %v2577
    %v2587 = vmul.f32 %v2586, %v2585
    %v2588 = vmul.f32 0.5, %v2587
    %v2589 = vsub.f32 1.5, %v2588
    %v2590 = vmul.f32 %v2585, %v2589
    %vm2591 = vweird.f32 %v2577
    %vm2592 = vweird.f32 %v2585
    %vm2593 = vmor %vm2591, %vm2592
    %v2594 = vsel %vm2593, %v2585, %v2590
    %v2595 = vrsqrt.pop %v2578
    %v2596 = vmul.f32 %v2595, %v2578
    %v2597 = vmul.f32 %v2596, %v2595
    %v2598 = vmul.f32 0.5, %v2597
    %v2599 = vsub.f32 1.5, %v2598
    %v2600 = vmul.f32 %v2595, %v2599
    %vm2601 = vweird.f32 %v2578
    %vm2602 = vweird.f32 %v2595
    %vm2603 = vmor %vm2601, %vm2602
    %v2604 = vsel %vm2603, %v2595, %v2600
    %v2605 = vrsqrt.pop %v2579
    %v2606 = vmul.f32 %v2605, %v2579
    %v2607 = vmul.f32 %v2606, %v2605
    %v2608 = vmul.f32 0.5, %v2607
    %v2609 = vsub.f32 1.5, %v2608
    %v2610 = vmul.f32 %v2605, %v2609
    %vm2611 = vweird.f32 %v2579
    %vm2612 = vweird.f32 %v2605
    %vm2613 = vmor %vm2611, %vm2612
    %v2614 = vsel %vm2613, %v2605, %v2610
    %v2615 = vrsqrt.pop %v2580
    %v2616 = vmul.f32 %v2615, %v2580
    %v2617 = vmul.f32 %v2616, %v2615
    %v2618 = vmul.f32 0.5, %v2617
    %v2619 = vsub.f32 1.5, %v2618
    %v2620 = vmul.f32 %v2615, %v2619
    %vm2621 = vweird.f32 %v2580
    %vm2622 = vweird.f32 %v2615
    %vm2623 = vmor %vm2621, %vm2622
    %v2624 = vsel %vm2623, %v2615, %v2620
    %v2625 = vrsqrt.pop %v2581
    %v2626 = vmul.f32 %v2625, %v2581
    %v2627 = vmul.f32 %v2626, %v2625
    %v2628 = vmul.f32 0.5, %v2627
    %v2629 = vsub.f32 1.5, %v2628
    %v2630 = vmul.f32 %v2625, %v2629
    %vm2631 = vweird.f32 %v2581
    %vm2632 = vweird.f32 %v2625
    %vm2633 = vmor %vm2631, %vm2632
    %v2634 = vsel %vm2633, %v2625, %v2630
    %v2635 = vrsqrt.pop %v2582
    %v2636 = vmul.f32 %v2635, %v2582
    %v2637 = vmul.f32 %v2636, %v2635
    %v2638 = vmul.f32 0.5, %v2637
    %v2639 = vsub.f32 1.5, %v2638
    %v2640 = vmul.f32 %v2635, %v2639
    %vm2641 = vweird.f32 %v2582
    %vm2642 = vweird.f32 %v2635
    %vm2643 = vmor %vm2641, %vm2642
    %v2644 = vsel %vm2643, %v2635, %v2640
    %v2645 = vrsqrt.pop %v2583
    %v2646 = vmul.f32 %v2645, %v2583
    %v2647 = vmul.f32 %v2646, %v2645
    %v2648 = vmul.f32 0.5, %v2647
    %v2649 = vsub.f32 1.5, %v2648
    %v2650 = vmul.f32 %v2645, %v2649
    %vm2651 = vweird.f32 %v2583
    %vm2652 = vweird.f32 %v2645
    %vm2653 = vmor %vm2651, %vm2652
    %v2654 = vsel %vm2653, %v2645, %v2650
    %v2655 = vrsqrt.pop %v2584
    %v2656 = vmul.f32 %v2655, %v2584
    %v2657 = vmul.f32 %v2656, %v2655
    %v2658 = vmul.f32 0.5, %v2657
    %v2659 = vsub.f32 1.5, %v2658
    %v2660 = vmul.f32 %v2655, %v2659
    %vm2661 = vweird.f32 %v2584
    %vm2662 = vweird.f32 %v2655
    %vm2663 = vmor %vm2661, %vm2662
    %v2664 = vsel %vm2663, %v2655, %v2660
    %v2665 = vmul.f32 %v2537, %v2594
    %v2666 = vmul.f32 %v2538, %v2604
    %v2667 = vmul.f32 %v2539, %v2614
    %v2668 = vmul.f32 %v2540, %v2624
    %v2669 = vmul.f32 %v2541, %v2634
    %v2670 = vmul.f32 %v2542, %v2644
    %v2671 = vmul.f32 %v2543, %v2654
    %v2672 = vmul.f32 %v2544, %v2664
    %v2673 = vperm.slane %v2511, 0
    %v2674 = vmul.f32 %v2665, %v2673
    %v2675 = vmul.f32 %v2666, %v2673
    %v2676 = vmul.f32 %v2667, %v2673
    %v2677 = vmul.f32 %v2668, %v2673
    %v2678 = vmul.f32 %v2669, %v2673
    %v2679 = vmul.f32 %v2670, %v2673
    %v2680 = vmul.f32 %v2671, %v2673
    %v2681 = vmul.f32 %v2672, %v2673
    %v2682 = vperm.slane %v2512, 0
    %v2683 = vadd.f32 %v2674, %v2682
    %v2684 = vadd.f32 %v2675, %v2682
    %v2685 = vadd.f32 %v2676, %v2682
    %v2686 = vadd.f32 %v2677, %v2682
    %v2687 = vadd.f32 %v2678, %v2682
    %v2688 = vadd.f32 %v2679, %v2682
    %v2689 = vadd.f32 %v2680, %v2682
    %v2690 = vadd.f32 %v2681, %v2682
    %2691 = vst [vmem:[#allocation13] sm:$0xff] %v2683
    %2692 = vst [vmem:[#allocation13 + $0x8] sm:$0xff] %v2684
    %2693 = vst [vmem:[#allocation13 + $0x10] sm:$0xff] %v2685
    %2694 = vst [vmem:[#allocation13 + $0x18] sm:$0xff] %v2686
    %2695 = vst [vmem:[#allocation13 + $0x20] sm:$0xff] %v2687
    %2696 = vst [vmem:[#allocation13 + $0x28] sm:$0xff] %v2688
    %2697 = vst [vmem:[#allocation13 + $0x30] sm:$0xff] %v2689
    %2698 = vst [vmem:[#allocation13 + $0x38] sm:$0xff] %v2690
    // Predicated region
    $region50: #{tpu_custom_call.1} parent=1 // pred_check
      _
    $region51: #{tpu_custom_call.1} parent=1 // pred_check_branch
      %2700 = sbr.rel (0) target = $region53
    $region52: #{tpu_custom_call.1} parent=1 // pred_region
      %2702 = vsyncadd [#allocation4], 0
      %s2703 = sshll.u32 [#allocation13], 4
      %s2704 = int_to_ptr.vmem [resolvable:$true] %s2703
      %s2705 = sshll.u32 %s6, 4
      %s2706 = int_to_ptr.hbm [resolvable:$true] %s2705
      %2711 = dma.vmem_to_hbm [thread:$0]  %s2704, 1024, %s2706, [#allocation4], 128, 128, 8
    $region53: #{tpu_custom_call.1} parent=1 // pred_fallthru
      _
    // Predicated region
    $region54: #{tpu_custom_call.1} parent=1 // pred_check
      _
    $region55: #{tpu_custom_call.1} parent=1 // pred_check_branch
      %2713 = sbr.rel (0) target = $region57
    $region56: #{tpu_custom_call.1} parent=1 // pred_region
      %2715 = dma.done [#allocation4], 1024
    $region57: #{tpu_custom_call.1} parent=1 // pred_fallthru
      _
    %2716 = vsyncpa [#allocation3], 1
    %2717 = vsyncpa [#allocation6], 1
    %2718 = vsyncpa [#allocation9], 1
    %2719 = vsyncpa [#allocation12], 1
    %2720 = vsyncpa [#allocation4], 1

</llo_original>
